<compile_context>
chip_gen: v7x
topology: tpu7x:2x2x1
jax: 0.10.0
libtpu: 0.0.40
codegen_flags: <defaults>
</compile_context>

<pallas_src>
import functools

import numpy as np

import jax
import jax.numpy as jnp
from jax.experimental import pallas as pl
from jax.experimental.pallas import tpu as pltpu


_TAPS = tuple((dy, dx) for dy in (-1, 0, 1) for dx in (-1, 0, 1))


# ----------------------------------------------------------------------------
# Host-side helpers (trace-time constants)
# ----------------------------------------------------------------------------
def _make_tap_masks(N, H, W):
    """(9, N*H*W) f32 validity mask per 3x3 tap ('same' zero padding).

    Uses per-image flat indices (col mod P) so rolled taps never leak across image
    boundaries after the batch-on-lanes fold."""
    P = H * W
    q = np.arange(N * P, dtype=np.int64) % P          # within-image flat pixel index
    h, w = q // W, q % W
    rows = []
    for dy, dx in _TAPS:
        rows.append((h + dy >= 0) & (h + dy < H) & (w + dx >= 0) & (w + dx < W))
    return jnp.asarray(np.stack(rows, axis=0).astype(np.float32))


# ----------------------------------------------------------------------------
# Fused kernel: conv_1_1 -> conv_2_1 -> head, all in VMEM, batch folded onto lanes
# ----------------------------------------------------------------------------
def _fused_forward_kernel(x_ref, m_ref, w_ref, b_ref, o_ref, *, W):
    x = x_ref[...]        # (8, NP)  input, channels 4..7 are zero pad
    masks = m_ref[...]    # (9, NP)  precomputed tap masks

    def conv3x3(a, w, b):
        """3x3 'same' conv in lane-dense (Cin, N*H*W) layout as a single MXU matmul (im2col)."""
        npx = a.shape[-1]
        taps = []
        for t, (dy, dx) in enumerate(_TAPS):
            if dy == 0 and dx == 0:
                taps.append(a)
                continue
            s = dy * W + dx                                  # want shifted[p] = a[p + s]
            rolled = pltpu.roll(a, (-s) % npx, axis=1)       # XLU lane rotation
            taps.append(rolled * masks[t:t + 1, :])          # zero out-of-image / wrapped reads
        patches = jnp.concatenate(taps, axis=0)              # (9*Cin, NP), sublane-aligned blocks
        y = jnp.dot(w, patches, preferred_element_type=jnp.float32) + b
        return jnp.maximum(y, 0.0)

    # conv_1_1 + BN + ReLU (BN folded)                        -> (8, NP)
    a1 = conv3x3(x, w_ref[0:8, 0:72], b_ref[0:8, :])
    # conv_2_1 + BN + ReLU (BN folded)                        -> (16, NP)
    a2 = conv3x3(a1, w_ref[8:24, 0:72], b_ref[8:24, :])
    # TODO(synk): stand-in head for smp.UnetPlusPlus(timm-efficientnet-b6, classes=2);
    # only the [N, 2, H, W] output contract is preserved, not the backbone numerics.
    ah = conv3x3(a2, w_ref[24:40, 0:144], b_ref[24:40, :])   # 9->16 3x3 + ReLU -> (16, NP)
    y = jnp.dot(w_ref[40:42, 0:16], ah,
                preferred_element_type=jnp.float32) + b_ref[40:42, :]   # 16->2 1x1 -> (2, NP)

    o_ref[...] = y.astype(o_ref.dtype)


# ----------------------------------------------------------------------------
# Wrapper (NCHW in, NCHW out; tiny host-side reshapes/pad, ~16 KB total)
# ----------------------------------------------------------------------------
@jax.jit
def multiview_net_forward(x_nchw, fp):
    N, C, H, W = x_nchw.shape
    P = H * W
    NP = N * P
    cin_p = 8

    # NCHW -> (Cin_pad, N*H*W): batch-on-lanes, lane-dense layout for the kernel.
    x = x_nchw.astype(jnp.float32).reshape(N, C, P)
    x = jnp.pad(x, ((0, 0), (0, cin_p - C), (0, 0)))
    x = jnp.transpose(x, (1, 0, 2)).reshape(cin_p, NP)

    masks = _make_tap_masks(N, H, W)                          # trace-time constant, (9, NP)

    flops = 2 * (8 * 72 + 16 * 72 + 16 * 144 + 2 * 16) * NP
    bytes_accessed = 4 * (cin_p * NP + 9 * NP + 48 * 144 + 48 + 2 * NP)

    out = pl.pallas_call(
        functools.partial(_fused_forward_kernel, W=W),
        out_shape=jax.ShapeDtypeStruct((2, NP), jnp.float32),
        in_specs=[pl.BlockSpec(memory_space=pltpu.MemorySpace.VMEM)] * 4,
        out_specs=pl.BlockSpec(memory_space=pltpu.MemorySpace.VMEM),
        cost_estimate=pl.CostEstimate(flops=flops, transcendentals=0,
                                      bytes_accessed=bytes_accessed),
        # TODO(synk): if H, W scale up, the (9*Cin, N*H*W) im2col patches become the VMEM cliff
        # (v7x has only 64 MiB): switch to 9 tap-accumulating micro-matmuls into an f32 VMEM
        # scratch or row-tile with a 1-row halo, and set vmem_limit_bytes explicitly.
    )(x, masks, fp["w"], fp["b"])

    # (2, N*P) -> (N, 2, H, W)
    return out.reshape(2, N, P).transpose(1, 0, 2).reshape(N, 2, H, W)


# ----------------------------------------------------------------------------
# Parameters (raw PyTorch-shaped params; then BN-fold + channel-pad + pack into two slabs)
# ----------------------------------------------------------------------------
def make_params(key):
    """Raw parameters with the same shapes/roles as the PyTorch module (OIHW conv weights)."""
    ks = jax.random.split(key, 12)
    p = {}
    # conv_1_1: Conv2d(4,6,3,3,bias=True) + BatchNorm2d(6)
    p["w1"] = 0.1 * jax.random.normal(ks[0], (6, 4, 3, 3), jnp.float32)
    p["b1"] = 0.05 * jax.random.normal(ks[1], (6,), jnp.float32)
    p["g1"] = 1.0 + 0.1 * jax.random.normal(ks[2], (6,), jnp.float32)
    p["beta1"] = 0.05 * jax.random.normal(ks[3], (6,), jnp.float32)
    p["m1"] = 0.02 * jax.random.normal(ks[4], (6,), jnp.float32)
    p["v1"] = jnp.abs(1.0 + 0.1 * jax.random.normal(ks[5], (6,), jnp.float32))
    # conv_2_1: Conv2d(6,9,3,3,bias=True) + BatchNorm2d(9)
    p["w2"] = 0.1 * jax.random.normal(ks[6], (9, 6, 3, 3), jnp.float32)
    p["b2"] = 0.05 * jax.random.normal(ks[7], (9,), jnp.float32)
    p["g2"] = 1.0 + 0.1 * jax.random.normal(ks[8], (9,), jnp.float32)
    p["beta2"] = 0.05 * jax.random.normal(ks[9], (9,), jnp.float32)
    p["m2"] = 0.02 * jax.random.normal(ks[10], (9,), jnp.float32)
    p["v2"] = jnp.abs(1.0 + 0.1 * jax.random.normal(ks[11], (9,), jnp.float32))
    # Stand-in head for smp.UnetPlusPlus(timm-efficientnet-b6, in_channels=9, classes=2)
    kh = jax.random.split(jax.random.fold_in(key, 99), 4)
    p["wh"] = 0.1 * jax.random.normal(kh[0], (16, 9, 3, 3), jnp.float32)
    p["bh"] = 0.05 * jax.random.normal(kh[1], (16,), jnp.float32)
    p["wseg"] = 0.1 * jax.random.normal(kh[2], (2, 16, 1, 1), jnp.float32)
    p["bseg"] = 0.05 * jax.random.normal(kh[3], (2,), jnp.float32)
    return p


def _flatten_conv(w_oihw, cout_pad, cin_pad):
    """(Cout,Cin,3,3) -> zero-pad channels -> (cout_pad, 9*cin_pad), tap-major / cin-minor."""
    cout, cin = w_oihw.shape[:2]
    w = jnp.pad(w_oihw, ((0, cout_pad - cout), (0, cin_pad - cin), (0, 0), (0, 0)))
    # column index (ky*3 + kx)*cin_pad + c matches the kernel's im2col row order.
    return jnp.transpose(w, (0, 2, 3, 1)).reshape(cout_pad, 9 * cin_pad)


def fold_and_pack_params(p, eps=1e-5):
    """Fold eval-mode BatchNorm into conv weights/bias, zero-pad channels to multiples of 8,
    and pack everything into one (48,144) weight slab + one (48,1) bias slab (static offsets).

    Padded rows/columns stay exactly zero so the padded activation channels remain zero
    through every ReLU (required for correctness of the channel-padding scheme)."""
    s1 = p["g1"] / jnp.sqrt(p["v1"] + eps)
    w1 = _flatten_conv(p["w1"] * s1[:, None, None, None], 8, 8)      # (8, 72)
    b1 = p["beta1"] + (p["b1"] - p["m1"]) * s1                       # (6,)

    s2 = p["g2"] / jnp.sqrt(p["v2"] + eps)
    w2 = _flatten_conv(p["w2"] * s2[:, None, None, None], 16, 8)     # (16, 72)
    b2 = p["beta2"] + (p["b2"] - p["m2"]) * s2                       # (9,)

    wh = _flatten_conv(p["wh"], 16, 16)                              # (16, 144)
    ws = p["wseg"].reshape(2, 16)                                    # (2, 16)

    w_slab = jnp.zeros((48, 144), jnp.float32)
    w_slab = w_slab.at[0:8, 0:72].set(w1)          # conv_1_1
    w_slab = w_slab.at[8:24, 0:72].set(w2)         # conv_2_1
    w_slab = w_slab.at[24:40, 0:144].set(wh)       # head 3x3
    w_slab = w_slab.at[40:42, 0:16].set(ws)        # head 1x1

    b_slab = jnp.zeros((48, 1), jnp.float32)
    b_slab = b_slab.at[0:6, 0].set(b1)
    b_slab = b_slab.at[8:17, 0].set(b2)
    b_slab = b_slab.at[24:40, 0].set(p["bh"])
    b_slab = b_slab.at[40:42, 0].set(p["bseg"])
    return {"w": w_slab, "b": b_slab}


if __name__ == "__main__":
    key = jax.random.PRNGKey(0)
    k_x, k_p = jax.random.split(key)

    # Small shapes consistent with the module: batch=2, in_channels=4, 16x16 spatial.
    x = jax.random.normal(k_x, (2, 4, 16, 16), jnp.float32)
    params = fold_and_pack_params(make_params(k_p))

    out = jax.block_until_ready(multiview_net_forward(x, params))

    assert out.shape == (2, 2, 16, 16), out.shape
    assert bool(jnp.all(jnp.isfinite(out)))
    print("KERNEL_OK")
</pallas_src>

<mosaic_0001>
module attributes {stable_mosaic.version = 11 : i64} {
  func.func @_fused_forward_kernel(%arg0: memref<8x512xf32, #tpu.memory_space<vmem>>, %arg1: memref<9x512xf32, #tpu.memory_space<vmem>>, %arg2: memref<48x144xf32, #tpu.memory_space<vmem>>, %arg3: memref<48x1xf32, #tpu.memory_space<vmem>>, %arg4: memref<2x512xf32, #tpu.memory_space<vmem>>) attributes {dimension_semantics = [], scalar_prefetch = 0 : i64, scratch_operands = 0 : i64, tpu.core_type = #tpu.core_type<tc>} {
    %c0 = arith.constant 0 : index
    %c0_0 = arith.constant 0 : index
    %0 = vector.load %arg0[%c0, %c0_0] : memref<8x512xf32, #tpu.memory_space<vmem>>, vector<8x512xf32>
    %c0_1 = arith.constant 0 : index
    %c0_2 = arith.constant 0 : index
    %1 = vector.load %arg1[%c0_1, %c0_2] : memref<9x512xf32, #tpu.memory_space<vmem>>, vector<9x512xf32>
    %c0_3 = arith.constant 0 : index
    %c0_4 = arith.constant 0 : index
    %2 = vector.load %arg2[%c0_3, %c0_4] : memref<48x144xf32, #tpu.memory_space<vmem>>, vector<8x72xf32>
    %c0_5 = arith.constant 0 : index
    %c0_6 = arith.constant 0 : index
    %3 = vector.load %arg3[%c0_5, %c0_6] : memref<48x1xf32, #tpu.memory_space<vmem>>, vector<8x1xf32>
    %c17_i32 = arith.constant 17 : i32
    %4 = tpu.dynamic_rotate %0 by %c17_i32 dim 1 : vector<8x512xf32>, i32 -> vector<8x512xf32>
    %5 = vector.extract_strided_slice %1 {offsets = [0, 0], sizes = [1, 512], strides = [1, 1]} : vector<9x512xf32> to vector<1x512xf32>
    %6 = vector.broadcast %5 : vector<1x512xf32> to vector<8x512xf32>
    %7 = arith.mulf %4, %6 : vector<8x512xf32>
    %c16_i32 = arith.constant 16 : i32
    %8 = tpu.dynamic_rotate %0 by %c16_i32 dim 1 : vector<8x512xf32>, i32 -> vector<8x512xf32>
    %9 = vector.extract_strided_slice %1 {offsets = [1, 0], sizes = [1, 512], strides = [1, 1]} : vector<9x512xf32> to vector<1x512xf32>
    %10 = vector.broadcast %9 : vector<1x512xf32> to vector<8x512xf32>
    %11 = arith.mulf %8, %10 : vector<8x512xf32>
    %c15_i32 = arith.constant 15 : i32
    %12 = tpu.dynamic_rotate %0 by %c15_i32 dim 1 : vector<8x512xf32>, i32 -> vector<8x512xf32>
    %13 = vector.extract_strided_slice %1 {offsets = [2, 0], sizes = [1, 512], strides = [1, 1]} : vector<9x512xf32> to vector<1x512xf32>
    %14 = vector.broadcast %13 : vector<1x512xf32> to vector<8x512xf32>
    %15 = arith.mulf %12, %14 : vector<8x512xf32>
    %c1_i32 = arith.constant 1 : i32
    %16 = tpu.dynamic_rotate %0 by %c1_i32 dim 1 : vector<8x512xf32>, i32 -> vector<8x512xf32>
    %17 = vector.extract_strided_slice %1 {offsets = [3, 0], sizes = [1, 512], strides = [1, 1]} : vector<9x512xf32> to vector<1x512xf32>
    %18 = vector.broadcast %17 : vector<1x512xf32> to vector<8x512xf32>
    %19 = arith.mulf %16, %18 : vector<8x512xf32>
    %c511_i32 = arith.constant 511 : i32
    %20 = tpu.dynamic_rotate %0 by %c511_i32 dim 1 : vector<8x512xf32>, i32 -> vector<8x512xf32>
    %21 = vector.extract_strided_slice %1 {offsets = [5, 0], sizes = [1, 512], strides = [1, 1]} : vector<9x512xf32> to vector<1x512xf32>
    %22 = vector.broadcast %21 : vector<1x512xf32> to vector<8x512xf32>
    %23 = arith.mulf %20, %22 : vector<8x512xf32>
    %c497_i32 = arith.constant 497 : i32
    %24 = tpu.dynamic_rotate %0 by %c497_i32 dim 1 : vector<8x512xf32>, i32 -> vector<8x512xf32>
    %25 = vector.extract_strided_slice %1 {offsets = [6, 0], sizes = [1, 512], strides = [1, 1]} : vector<9x512xf32> to vector<1x512xf32>
    %26 = vector.broadcast %25 : vector<1x512xf32> to vector<8x512xf32>
    %27 = arith.mulf %24, %26 : vector<8x512xf32>
    %c496_i32 = arith.constant 496 : i32
    %28 = tpu.dynamic_rotate %0 by %c496_i32 dim 1 : vector<8x512xf32>, i32 -> vector<8x512xf32>
    %29 = vector.extract_strided_slice %1 {offsets = [7, 0], sizes = [1, 512], strides = [1, 1]} : vector<9x512xf32> to vector<1x512xf32>
    %30 = vector.broadcast %29 : vector<1x512xf32> to vector<8x512xf32>
    %31 = arith.mulf %28, %30 : vector<8x512xf32>
    %c495_i32 = arith.constant 495 : i32
    %32 = tpu.dynamic_rotate %0 by %c495_i32 dim 1 : vector<8x512xf32>, i32 -> vector<8x512xf32>
    %33 = vector.extract_strided_slice %1 {offsets = [8, 0], sizes = [1, 512], strides = [1, 1]} : vector<9x512xf32> to vector<1x512xf32>
    %34 = vector.broadcast %33 : vector<1x512xf32> to vector<8x512xf32>
    %35 = arith.mulf %32, %34 : vector<8x512xf32>
    %36 = tpu.concatenate %7, %11, %15, %19, %0, %23, %27, %31, %35 in 0 : vector<8x512xf32>, vector<8x512xf32>, vector<8x512xf32>, vector<8x512xf32>, vector<8x512xf32>, vector<8x512xf32>, vector<8x512xf32>, vector<8x512xf32>, vector<8x512xf32> -> vector<72x512xf32>
    %cst = arith.constant dense<0.000000e+00> : vector<8x512xf32>
    %37 = tpu.matmul %2, %36, %cst {dimension_numbers = #tpu.dot_dimension_numbers<[1], [0], [0], [1], [0, 0, 1, 1], [], []>} : vector<8x72xf32>, vector<72x512xf32>, vector<8x512xf32> -> vector<8x512xf32>
    %38 = vector.broadcast %3 : vector<8x1xf32> to vector<8x512xf32>
    %39 = arith.addf %37, %38 : vector<8x512xf32>
    %cst_7 = arith.constant 0.000000e+00 : f32
    %40 = vector.broadcast %cst_7 : f32 to vector<8x512xf32>
    %41 = arith.maximumf %39, %40 : vector<8x512xf32>
    %c8 = arith.constant 8 : index
    %c0_8 = arith.constant 0 : index
    %42 = vector.load %arg2[%c8, %c0_8] : memref<48x144xf32, #tpu.memory_space<vmem>>, vector<16x72xf32>
    %c8_9 = arith.constant 8 : index
    %c0_10 = arith.constant 0 : index
    %43 = vector.load %arg3[%c8_9, %c0_10] : memref<48x1xf32, #tpu.memory_space<vmem>>, vector<16x1xf32>
    %c17_i32_11 = arith.constant 17 : i32
    %44 = tpu.dynamic_rotate %41 by %c17_i32_11 dim 1 : vector<8x512xf32>, i32 -> vector<8x512xf32>
    %45 = vector.extract_strided_slice %1 {offsets = [0, 0], sizes = [1, 512], strides = [1, 1]} : vector<9x512xf32> to vector<1x512xf32>
    %46 = vector.broadcast %45 : vector<1x512xf32> to vector<8x512xf32>
    %47 = arith.mulf %44, %46 : vector<8x512xf32>
    %c16_i32_12 = arith.constant 16 : i32
    %48 = tpu.dynamic_rotate %41 by %c16_i32_12 dim 1 : vector<8x512xf32>, i32 -> vector<8x512xf32>
    %49 = vector.extract_strided_slice %1 {offsets = [1, 0], sizes = [1, 512], strides = [1, 1]} : vector<9x512xf32> to vector<1x512xf32>
    %50 = vector.broadcast %49 : vector<1x512xf32> to vector<8x512xf32>
    %51 = arith.mulf %48, %50 : vector<8x512xf32>
    %c15_i32_13 = arith.constant 15 : i32
    %52 = tpu.dynamic_rotate %41 by %c15_i32_13 dim 1 : vector<8x512xf32>, i32 -> vector<8x512xf32>
    %53 = vector.extract_strided_slice %1 {offsets = [2, 0], sizes = [1, 512], strides = [1, 1]} : vector<9x512xf32> to vector<1x512xf32>
    %54 = vector.broadcast %53 : vector<1x512xf32> to vector<8x512xf32>
    %55 = arith.mulf %52, %54 : vector<8x512xf32>
    %c1_i32_14 = arith.constant 1 : i32
    %56 = tpu.dynamic_rotate %41 by %c1_i32_14 dim 1 : vector<8x512xf32>, i32 -> vector<8x512xf32>
    %57 = vector.extract_strided_slice %1 {offsets = [3, 0], sizes = [1, 512], strides = [1, 1]} : vector<9x512xf32> to vector<1x512xf32>
    %58 = vector.broadcast %57 : vector<1x512xf32> to vector<8x512xf32>
    %59 = arith.mulf %56, %58 : vector<8x512xf32>
    %c511_i32_15 = arith.constant 511 : i32
    %60 = tpu.dynamic_rotate %41 by %c511_i32_15 dim 1 : vector<8x512xf32>, i32 -> vector<8x512xf32>
    %61 = vector.extract_strided_slice %1 {offsets = [5, 0], sizes = [1, 512], strides = [1, 1]} : vector<9x512xf32> to vector<1x512xf32>
    %62 = vector.broadcast %61 : vector<1x512xf32> to vector<8x512xf32>
    %63 = arith.mulf %60, %62 : vector<8x512xf32>
    %c497_i32_16 = arith.constant 497 : i32
    %64 = tpu.dynamic_rotate %41 by %c497_i32_16 dim 1 : vector<8x512xf32>, i32 -> vector<8x512xf32>
    %65 = vector.extract_strided_slice %1 {offsets = [6, 0], sizes = [1, 512], strides = [1, 1]} : vector<9x512xf32> to vector<1x512xf32>
    %66 = vector.broadcast %65 : vector<1x512xf32> to vector<8x512xf32>
    %67 = arith.mulf %64, %66 : vector<8x512xf32>
    %c496_i32_17 = arith.constant 496 : i32
    %68 = tpu.dynamic_rotate %41 by %c496_i32_17 dim 1 : vector<8x512xf32>, i32 -> vector<8x512xf32>
    %69 = vector.extract_strided_slice %1 {offsets = [7, 0], sizes = [1, 512], strides = [1, 1]} : vector<9x512xf32> to vector<1x512xf32>
    %70 = vector.broadcast %69 : vector<1x512xf32> to vector<8x512xf32>
    %71 = arith.mulf %68, %70 : vector<8x512xf32>
    %c495_i32_18 = arith.constant 495 : i32
    %72 = tpu.dynamic_rotate %41 by %c495_i32_18 dim 1 : vector<8x512xf32>, i32 -> vector<8x512xf32>
    %73 = vector.extract_strided_slice %1 {offsets = [8, 0], sizes = [1, 512], strides = [1, 1]} : vector<9x512xf32> to vector<1x512xf32>
    %74 = vector.broadcast %73 : vector<1x512xf32> to vector<8x512xf32>
    %75 = arith.mulf %72, %74 : vector<8x512xf32>
    %76 = tpu.concatenate %47, %51, %55, %59, %41, %63, %67, %71, %75 in 0 : vector<8x512xf32>, vector<8x512xf32>, vector<8x512xf32>, vector<8x512xf32>, vector<8x512xf32>, vector<8x512xf32>, vector<8x512xf32>, vector<8x512xf32>, vector<8x512xf32> -> vector<72x512xf32>
    %cst_19 = arith.constant dense<0.000000e+00> : vector<16x512xf32>
    %77 = tpu.matmul %42, %76, %cst_19 {dimension_numbers = #tpu.dot_dimension_numbers<[1], [0], [0], [1], [0, 0, 1, 1], [], []>} : vector<16x72xf32>, vector<72x512xf32>, vector<16x512xf32> -> vector<16x512xf32>
    %78 = vector.broadcast %43 : vector<16x1xf32> to vector<16x512xf32>
    %79 = arith.addf %77, %78 : vector<16x512xf32>
    %cst_20 = arith.constant 0.000000e+00 : f32
    %80 = vector.broadcast %cst_20 : f32 to vector<16x512xf32>
    %81 = arith.maximumf %79, %80 : vector<16x512xf32>
    %c24 = arith.constant 24 : index
    %c0_21 = arith.constant 0 : index
    %82 = vector.load %arg2[%c24, %c0_21] : memref<48x144xf32, #tpu.memory_space<vmem>>, vector<16x144xf32>
    %c24_22 = arith.constant 24 : index
    %c0_23 = arith.constant 0 : index
    %83 = vector.load %arg3[%c24_22, %c0_23] : memref<48x1xf32, #tpu.memory_space<vmem>>, vector<16x1xf32>
    %c17_i32_24 = arith.constant 17 : i32
    %84 = tpu.dynamic_rotate %81 by %c17_i32_24 dim 1 : vector<16x512xf32>, i32 -> vector<16x512xf32>
    %85 = vector.extract_strided_slice %1 {offsets = [0, 0], sizes = [1, 512], strides = [1, 1]} : vector<9x512xf32> to vector<1x512xf32>
    %86 = vector.broadcast %85 : vector<1x512xf32> to vector<16x512xf32>
    %87 = arith.mulf %84, %86 : vector<16x512xf32>
    %c16_i32_25 = arith.constant 16 : i32
    %88 = tpu.dynamic_rotate %81 by %c16_i32_25 dim 1 : vector<16x512xf32>, i32 -> vector<16x512xf32>
    %89 = vector.extract_strided_slice %1 {offsets = [1, 0], sizes = [1, 512], strides = [1, 1]} : vector<9x512xf32> to vector<1x512xf32>
    %90 = vector.broadcast %89 : vector<1x512xf32> to vector<16x512xf32>
    %91 = arith.mulf %88, %90 : vector<16x512xf32>
    %c15_i32_26 = arith.constant 15 : i32
    %92 = tpu.dynamic_rotate %81 by %c15_i32_26 dim 1 : vector<16x512xf32>, i32 -> vector<16x512xf32>
    %93 = vector.extract_strided_slice %1 {offsets = [2, 0], sizes = [1, 512], strides = [1, 1]} : vector<9x512xf32> to vector<1x512xf32>
    %94 = vector.broadcast %93 : vector<1x512xf32> to vector<16x512xf32>
    %95 = arith.mulf %92, %94 : vector<16x512xf32>
    %c1_i32_27 = arith.constant 1 : i32
    %96 = tpu.dynamic_rotate %81 by %c1_i32_27 dim 1 : vector<16x512xf32>, i32 -> vector<16x512xf32>
    %97 = vector.extract_strided_slice %1 {offsets = [3, 0], sizes = [1, 512], strides = [1, 1]} : vector<9x512xf32> to vector<1x512xf32>
    %98 = vector.broadcast %97 : vector<1x512xf32> to vector<16x512xf32>
    %99 = arith.mulf %96, %98 : vector<16x512xf32>
    %c511_i32_28 = arith.constant 511 : i32
    %100 = tpu.dynamic_rotate %81 by %c511_i32_28 dim 1 : vector<16x512xf32>, i32 -> vector<16x512xf32>
    %101 = vector.extract_strided_slice %1 {offsets = [5, 0], sizes = [1, 512], strides = [1, 1]} : vector<9x512xf32> to vector<1x512xf32>
    %102 = vector.broadcast %101 : vector<1x512xf32> to vector<16x512xf32>
    %103 = arith.mulf %100, %102 : vector<16x512xf32>
    %c497_i32_29 = arith.constant 497 : i32
    %104 = tpu.dynamic_rotate %81 by %c497_i32_29 dim 1 : vector<16x512xf32>, i32 -> vector<16x512xf32>
    %105 = vector.extract_strided_slice %1 {offsets = [6, 0], sizes = [1, 512], strides = [1, 1]} : vector<9x512xf32> to vector<1x512xf32>
    %106 = vector.broadcast %105 : vector<1x512xf32> to vector<16x512xf32>
    %107 = arith.mulf %104, %106 : vector<16x512xf32>
    %c496_i32_30 = arith.constant 496 : i32
    %108 = tpu.dynamic_rotate %81 by %c496_i32_30 dim 1 : vector<16x512xf32>, i32 -> vector<16x512xf32>
    %109 = vector.extract_strided_slice %1 {offsets = [7, 0], sizes = [1, 512], strides = [1, 1]} : vector<9x512xf32> to vector<1x512xf32>
    %110 = vector.broadcast %109 : vector<1x512xf32> to vector<16x512xf32>
    %111 = arith.mulf %108, %110 : vector<16x512xf32>
    %c495_i32_31 = arith.constant 495 : i32
    %112 = tpu.dynamic_rotate %81 by %c495_i32_31 dim 1 : vector<16x512xf32>, i32 -> vector<16x512xf32>
    %113 = vector.extract_strided_slice %1 {offsets = [8, 0], sizes = [1, 512], strides = [1, 1]} : vector<9x512xf32> to vector<1x512xf32>
    %114 = vector.broadcast %113 : vector<1x512xf32> to vector<16x512xf32>
    %115 = arith.mulf %112, %114 : vector<16x512xf32>
    %116 = tpu.concatenate %87, %91, %95, %99, %81, %103, %107, %111, %115 in 0 : vector<16x512xf32>, vector<16x512xf32>, vector<16x512xf32>, vector<16x512xf32>, vector<16x512xf32>, vector<16x512xf32>, vector<16x512xf32>, vector<16x512xf32>, vector<16x512xf32> -> vector<144x512xf32>
    %cst_32 = arith.constant dense<0.000000e+00> : vector<16x512xf32>
    %117 = tpu.matmul %82, %116, %cst_32 {dimension_numbers = #tpu.dot_dimension_numbers<[1], [0], [0], [1], [0, 0, 1, 1], [], []>} : vector<16x144xf32>, vector<144x512xf32>, vector<16x512xf32> -> vector<16x512xf32>
    %118 = vector.broadcast %83 : vector<16x1xf32> to vector<16x512xf32>
    %119 = arith.addf %117, %118 : vector<16x512xf32>
    %cst_33 = arith.constant 0.000000e+00 : f32
    %120 = vector.broadcast %cst_33 : f32 to vector<16x512xf32>
    %121 = arith.maximumf %119, %120 : vector<16x512xf32>
    %c40 = arith.constant 40 : index
    %c0_34 = arith.constant 0 : index
    %122 = vector.load %arg2[%c40, %c0_34] : memref<48x144xf32, #tpu.memory_space<vmem>>, vector<2x16xf32>
    %cst_35 = arith.constant dense<0.000000e+00> : vector<2x512xf32>
    %123 = tpu.matmul %122, %121, %cst_35 {dimension_numbers = #tpu.dot_dimension_numbers<[1], [0], [0], [1], [0, 0, 1, 1], [], []>} : vector<2x16xf32>, vector<16x512xf32>, vector<2x512xf32> -> vector<2x512xf32>
    %c40_36 = arith.constant 40 : index
    %c0_37 = arith.constant 0 : index
    %124 = vector.load %arg3[%c40_36, %c0_37] : memref<48x1xf32, #tpu.memory_space<vmem>>, vector<2x1xf32>
    %125 = vector.broadcast %124 : vector<2x1xf32> to vector<2x512xf32>
    %126 = arith.addf %123, %125 : vector<2x512xf32>
    %c0_38 = arith.constant 0 : index
    %c0_39 = arith.constant 0 : index
    %127 = vector.load %arg4[%c0_38, %c0_39] : memref<2x512xf32, #tpu.memory_space<vmem>>, vector<2x512xf32>
    tpu.vector_store %arg4[%c0_38, %c0_39], %126 {strides = array<i32>} : memref<2x512xf32, #tpu.memory_space<vmem>>, vector<2x512xf32>,
    return
  }
}

</mosaic_0001>

<llo_original>
// kernel: multiview_net_forward.1
$region0: #{multiview_net_forward.1}
  #allocation0 [shape = 'u32[]', space=smem, size = 0x4, offset = 0x4, fixed_abs, tag = 'smem constant byte address 0x4 - core index']
  #allocation1 [shape = 'u32[144,128]{1,0:T(1,128)}', space=vmem, size = 0x12000, scoped, tag = 'internal scratch']
  %s0 = inlined_call_operand.vmem [shape: f32[8,512], index: 0, kind: input, shape index: {}]
  %s1 = inlined_call_operand.vmem [shape: f32[9,512], index: 1, kind: input, shape index: {}]
  %s2 = inlined_call_operand.vmem [shape: f32[48,144], index: 2, kind: input, shape index: {}]
  %s3 = inlined_call_operand.vmem [shape: f32[48,1], index: 3, kind: input, shape index: {}]
  %s4 = inlined_call_operand.vmem [shape: f32[2,512], index: 4, kind: output, shape index: {}]
  %s5 = sld [smem:[#allocation0]]
  $region26: #{multiview_net_forward.1} parent=0
    _
  %s7 = ssub.s32 1, %s5
  %s8 = scalar_select 0, %s7, %s5
  // Predicated region
  $region2: #{multiview_net_forward.1} parent=0 // pred_check
    _
  $region3: #{multiview_net_forward.1} parent=0 // pred_check_branch
    %10 = sbr.rel (0) target = $region5
  $region4: #{multiview_net_forward.1} parent=0 // pred_region
    _
  $region5: #{multiview_net_forward.1} parent=0 // pred_fallthru
    _
  // Predicated region
  $region6: #{multiview_net_forward.1} parent=0 // pred_check
    _
  $region7: #{multiview_net_forward.1} parent=0 // pred_check_branch
    %12 = sbr.rel (0) target = $region9
  $region8: #{multiview_net_forward.1} parent=0 // pred_region
    _
  $region9: #{multiview_net_forward.1} parent=0 // pred_fallthru
    _
  // Predicated region
  $region10: #{multiview_net_forward.1} parent=0 // pred_check
    _
  $region11: #{multiview_net_forward.1} parent=0 // pred_check_branch
    %14 = sbr.rel (0) target = $region13
  $region12: #{multiview_net_forward.1} parent=0 // pred_region
    _
  $region13: #{multiview_net_forward.1} parent=0 // pred_fallthru
    _
  // Predicated region
  $region14: #{multiview_net_forward.1} parent=0 // pred_check
    _
  $region15: #{multiview_net_forward.1} parent=0 // pred_check_branch
    %16 = sbr.rel (0) target = $region17
  $region16: #{multiview_net_forward.1} parent=0 // pred_region
    _
  $region17: #{multiview_net_forward.1} parent=0 // pred_fallthru
    _
  %v17 = vld [vmem:[%s0] sm:$0xff]
  %v18 = vld [vmem:[%s0 + $0x8] sm:$0xff]
  %v19 = vld [vmem:[%s0 + $0x10] sm:$0xff]
  %v20 = vld [vmem:[%s0 + $0x18] sm:$0xff]
  %v21 = vld [vmem:[%s1] sm:$0xff]
  %v22 = vld [vmem:[%s1 + $0x8] sm:$0xff]
  %v23 = vld [vmem:[%s1 + $0x10] sm:$0xff]
  %v24 = vld [vmem:[%s1 + $0x18] sm:$0xff]
  %v25 = vld [vmem:[%s1 + $0x20] sm:$0x1]
  %v26 = vld [vmem:[%s1 + $0x28] sm:$0x1]
  %v27 = vld [vmem:[%s1 + $0x30] sm:$0x1]
  %v28 = vld [vmem:[%s1 + $0x38] sm:$0x1]
  %v29 = vld [vmem:[%s2] sm:$0xff]
  %v30 = vld [vmem:[%s3] sm:$0xff]
  %31 = vrot.lane.b32.xlu0 %v17, 17
  %v32 = vpop.permute.xlu0 %31
  %33 = vrot.lane.b32.xlu0 %v18, 17
  %v34 = vpop.permute.xlu0 %33
  %35 = vrot.lane.b32.xlu0 %v19, 17
  %v36 = vpop.permute.xlu0 %35
  %37 = vrot.lane.b32.xlu0 %v20, 17
  %v38 = vpop.permute.xlu0 %37
  %v39 = vlaneseq
  %v40 = vand.u32 %v39, 127
  %vm41 = vcmp.lt.s32.totalorder %v40, 17
  %v42 = vsel %vm41, %v36, %v38
  %v43 = vsel %vm41, %v34, %v36
  %v44 = vsel %vm41, %v32, %v34
  %v45 = vsel %vm41, %v38, %v32
  %v46 = vlaneseq
  %v47 = vshrl.u32 %v46, 7
  %v48 = vsub.s32 0, %v47
  %v49 = vrot.slane %v21, %v48
  %v50 = vlaneseq
  %v51 = vshrl.u32 %v50, 7
  %v52 = vsub.s32 0, %v51
  %v53 = vrot.slane %v22, %v52
  %v54 = vlaneseq
  %v55 = vshrl.u32 %v54, 7
  %v56 = vsub.s32 0, %v55
  %v57 = vrot.slane %v23, %v56
  %v58 = vlaneseq
  %v59 = vshrl.u32 %v58, 7
  %v60 = vsub.s32 0, %v59
  %v61 = vrot.slane %v24, %v60
  %v62 = vmul.f32 %v45, %v49
  %v63 = vmul.f32 %v44, %v53
  %v64 = vmul.f32 %v43, %v57
  %v65 = vmul.f32 %v42, %v61
  %66 = vrot.lane.b32.xlu0 %v17, 16
  %v67 = vpop.permute.xlu0 %66
  %68 = vrot.lane.b32.xlu0 %v18, 16
  %v69 = vpop.permute.xlu0 %68
  %70 = vrot.lane.b32.xlu0 %v19, 16
  %v71 = vpop.permute.xlu0 %70
  %72 = vrot.lane.b32.xlu0 %v20, 16
  %v73 = vpop.permute.xlu0 %72
  %vm74 = vcmp.lt.s32.totalorder %v40, 16
  %v75 = vsel %vm74, %v71, %v73
  %v76 = vsel %vm74, %v69, %v71
  %v77 = vsel %vm74, %v67, %v69
  %v78 = vsel %vm74, %v73, %v67
  %v79 = vlaneseq
  %v80 = vshrl.u32 %v79, 7
  %v81 = vsub.s32 1, %v80
  %v82 = vrot.slane %v21, %v81
  %v83 = vlaneseq
  %v84 = vshrl.u32 %v83, 7
  %v85 = vsub.s32 1, %v84
  %v86 = vrot.slane %v22, %v85
  %v87 = vlaneseq
  %v88 = vshrl.u32 %v87, 7
  %v89 = vsub.s32 1, %v88
  %v90 = vrot.slane %v23, %v89
  %v91 = vlaneseq
  %v92 = vshrl.u32 %v91, 7
  %v93 = vsub.s32 1, %v92
  %v94 = vrot.slane %v24, %v93
  %v95 = vmul.f32 %v78, %v82
  %v96 = vmul.f32 %v77, %v86
  %v97 = vmul.f32 %v76, %v90
  %v98 = vmul.f32 %v75, %v94
  %99 = vrot.lane.b32.xlu0 %v17, 15
  %v100 = vpop.permute.xlu0 %99
  %101 = vrot.lane.b32.xlu0 %v18, 15
  %v102 = vpop.permute.xlu0 %101
  %103 = vrot.lane.b32.xlu0 %v19, 15
  %v104 = vpop.permute.xlu0 %103
  %105 = vrot.lane.b32.xlu0 %v20, 15
  %v106 = vpop.permute.xlu0 %105
  %vm107 = vcmp.lt.s32.totalorder %v40, 15
  %v108 = vsel %vm107, %v104, %v106
  %v109 = vsel %vm107, %v102, %v104
  %v110 = vsel %vm107, %v100, %v102
  %v111 = vsel %vm107, %v106, %v100
  %v112 = vlaneseq
  %v113 = vshrl.u32 %v112, 7
  %v114 = vsub.s32 2, %v113
  %v115 = vrot.slane %v21, %v114
  %v116 = vlaneseq
  %v117 = vshrl.u32 %v116, 7
  %v118 = vsub.s32 2, %v117
  %v119 = vrot.slane %v22, %v118
  %v120 = vlaneseq
  %v121 = vshrl.u32 %v120, 7
  %v122 = vsub.s32 2, %v121
  %v123 = vrot.slane %v23, %v122
  %v124 = vlaneseq
  %v125 = vshrl.u32 %v124, 7
  %v126 = vsub.s32 2, %v125
  %v127 = vrot.slane %v24, %v126
  %v128 = vmul.f32 %v111, %v115
  %v129 = vmul.f32 %v110, %v119
  %v130 = vmul.f32 %v109, %v123
  %v131 = vmul.f32 %v108, %v127
  %132 = vrot.lane.b32.xlu0 %v17, 1
  %v133 = vpop.permute.xlu0 %132
  %134 = vrot.lane.b32.xlu0 %v18, 1
  %v135 = vpop.permute.xlu0 %134
  %136 = vrot.lane.b32.xlu0 %v19, 1
  %v137 = vpop.permute.xlu0 %136
  %138 = vrot.lane.b32.xlu0 %v20, 1
  %v139 = vpop.permute.xlu0 %138
  %vm140 = vcmp.lt.s32.totalorder %v40, 1
  %v141 = vsel %vm140, %v137, %v139
  %v142 = vsel %vm140, %v135, %v137
  %v143 = vsel %vm140, %v133, %v135
  %v144 = vsel %vm140, %v139, %v133
  %v145 = vlaneseq
  %v146 = vshrl.u32 %v145, 7
  %v147 = vsub.s32 3, %v146
  %v148 = vrot.slane %v21, %v147
  %v149 = vlaneseq
  %v150 = vshrl.u32 %v149, 7
  %v151 = vsub.s32 3, %v150
  %v152 = vrot.slane %v22, %v151
  %v153 = vlaneseq
  %v154 = vshrl.u32 %v153, 7
  %v155 = vsub.s32 3, %v154
  %v156 = vrot.slane %v23, %v155
  %v157 = vlaneseq
  %v158 = vshrl.u32 %v157, 7
  %v159 = vsub.s32 3, %v158
  %v160 = vrot.slane %v24, %v159
  %v161 = vmul.f32 %v144, %v148
  %v162 = vmul.f32 %v143, %v152
  %v163 = vmul.f32 %v142, %v156
  %v164 = vmul.f32 %v141, %v160
  %165 = vrot.lane.b32.xlu0 %v17, 127
  %v166 = vpop.permute.xlu0 %165
  %167 = vrot.lane.b32.xlu0 %v18, 127
  %v168 = vpop.permute.xlu0 %167
  %169 = vrot.lane.b32.xlu0 %v19, 127
  %v170 = vpop.permute.xlu0 %169
  %171 = vrot.lane.b32.xlu0 %v20, 127
  %v172 = vpop.permute.xlu0 %171
  %vm173 = vcmp.lt.s32.totalorder %v40, 127
  %v174 = vsel %vm173, %v170, %v172
  %v175 = vsel %vm173, %v168, %v170
  %v176 = vsel %vm173, %v166, %v168
  %v177 = vsel %vm173, %v172, %v166
  %v178 = vlaneseq
  %v179 = vshrl.u32 %v178, 7
  %v180 = vsub.s32 5, %v179
  %v181 = vrot.slane %v21, %v180
  %v182 = vlaneseq
  %v183 = vshrl.u32 %v182, 7
  %v184 = vsub.s32 5, %v183
  %v185 = vrot.slane %v22, %v184
  %v186 = vlaneseq
  %v187 = vshrl.u32 %v186, 7
  %v188 = vsub.s32 5, %v187
  %v189 = vrot.slane %v23, %v188
  %v190 = vlaneseq
  %v191 = vshrl.u32 %v190, 7
  %v192 = vsub.s32 5, %v191
  %v193 = vrot.slane %v24, %v192
  %v194 = vmul.f32 %v176, %v181
  %v195 = vmul.f32 %v175, %v185
  %v196 = vmul.f32 %v174, %v189
  %v197 = vmul.f32 %v177, %v193
  %198 = vrot.lane.b32.xlu0 %v17, 113
  %v199 = vpop.permute.xlu0 %198
  %200 = vrot.lane.b32.xlu0 %v18, 113
  %v201 = vpop.permute.xlu0 %200
  %202 = vrot.lane.b32.xlu0 %v19, 113
  %v203 = vpop.permute.xlu0 %202
  %204 = vrot.lane.b32.xlu0 %v20, 113
  %v205 = vpop.permute.xlu0 %204
  %vm206 = vcmp.lt.s32.totalorder %v40, 113
  %v207 = vsel %vm206, %v203, %v205
  %v208 = vsel %vm206, %v201, %v203
  %v209 = vsel %vm206, %v199, %v201
  %v210 = vsel %vm206, %v205, %v199
  %v211 = vlaneseq
  %v212 = vshrl.u32 %v211, 7
  %v213 = vsub.s32 6, %v212
  %v214 = vrot.slane %v21, %v213
  %v215 = vlaneseq
  %v216 = vshrl.u32 %v215, 7
  %v217 = vsub.s32 6, %v216
  %v218 = vrot.slane %v22, %v217
  %v219 = vlaneseq
  %v220 = vshrl.u32 %v219, 7
  %v221 = vsub.s32 6, %v220
  %v222 = vrot.slane %v23, %v221
  %v223 = vlaneseq
  %v224 = vshrl.u32 %v223, 7
  %v225 = vsub.s32 6, %v224
  %v226 = vrot.slane %v24, %v225
  %v227 = vmul.f32 %v209, %v214
  %v228 = vmul.f32 %v208, %v218
  %v229 = vmul.f32 %v207, %v222
  %v230 = vmul.f32 %v210, %v226
  %231 = vrot.lane.b32.xlu0 %v17, 112
  %v232 = vpop.permute.xlu0 %231
  %233 = vrot.lane.b32.xlu0 %v18, 112
  %v234 = vpop.permute.xlu0 %233
  %235 = vrot.lane.b32.xlu0 %v19, 112
  %v236 = vpop.permute.xlu0 %235
  %237 = vrot.lane.b32.xlu0 %v20, 112
  %v238 = vpop.permute.xlu0 %237
  %vm239 = vcmp.lt.s32.totalorder %v40, 112
  %v240 = vsel %vm239, %v236, %v238
  %v241 = vsel %vm239, %v234, %v236
  %v242 = vsel %vm239, %v232, %v234
  %v243 = vsel %vm239, %v238, %v232
  %v244 = vlaneseq
  %v245 = vshrl.u32 %v244, 7
  %v246 = vsub.s32 7, %v245
  %v247 = vrot.slane %v21, %v246
  %v248 = vlaneseq
  %v249 = vshrl.u32 %v248, 7
  %v250 = vsub.s32 7, %v249
  %v251 = vrot.slane %v22, %v250
  %v252 = vlaneseq
  %v253 = vshrl.u32 %v252, 7
  %v254 = vsub.s32 7, %v253
  %v255 = vrot.slane %v23, %v254
  %v256 = vlaneseq
  %v257 = vshrl.u32 %v256, 7
  %v258 = vsub.s32 7, %v257
  %v259 = vrot.slane %v24, %v258
  %v260 = vmul.f32 %v242, %v247
  %v261 = vmul.f32 %v241, %v251
  %v262 = vmul.f32 %v240, %v255
  %v263 = vmul.f32 %v243, %v259
  %264 = vrot.lane.b32.xlu0 %v17, 111
  %v265 = vpop.permute.xlu0 %264
  %266 = vrot.lane.b32.xlu0 %v18, 111
  %v267 = vpop.permute.xlu0 %266
  %268 = vrot.lane.b32.xlu0 %v19, 111
  %v269 = vpop.permute.xlu0 %268
  %270 = vrot.lane.b32.xlu0 %v20, 111
  %v271 = vpop.permute.xlu0 %270
  %vm272 = vcmp.lt.s32.totalorder %v40, 111
  %v273 = vsel %vm272, %v269, %v271
  %v274 = vsel %vm272, %v267, %v269
  %v275 = vsel %vm272, %v265, %v267
  %v276 = vsel %vm272, %v271, %v265
  %v277 = vlaneseq
  %v278 = vshrl.u32 %v277, 7
  %v279 = vsub.s32 0, %v278
  %v280 = vrot.slane %v25, %v279
  %v281 = vlaneseq
  %v282 = vshrl.u32 %v281, 7
  %v283 = vsub.s32 0, %v282
  %v284 = vrot.slane %v26, %v283
  %v285 = vlaneseq
  %v286 = vshrl.u32 %v285, 7
  %v287 = vsub.s32 0, %v286
  %v288 = vrot.slane %v27, %v287
  %v289 = vlaneseq
  %v290 = vshrl.u32 %v289, 7
  %v291 = vsub.s32 0, %v290
  %v292 = vrot.slane %v28, %v291
  %v293 = vmul.f32 %v275, %v280
  %v294 = vmul.f32 %v274, %v284
  %v295 = vmul.f32 %v273, %v288
  %v296 = vmul.f32 %v276, %v292
  %298 = vset.pattern.permute.xlu0 0
  %299 = vperm.xlu0 %298, %v30
  %v300 = vpop.permute.xlu0 %299
  %vm302 = vcmask 588800
  %v304 = vsel %vm302, %v29, 0
  %306 = vmatprep.subr.mxu0 %v63
  %307 = vmatpush1.msra.mxu0 %v62
  %308 = vmatprep.subr.mxu0 %v96
  %309 = vmatpush1.msra.mxu0 %v95
  %310 = vmatprep.subr.mxu0 %v129
  %311 = vmatpush1.msra.mxu0 %v128
  %312 = vmatprep.subr.mxu0 %v162
  %313 = vmatpush1.msra.mxu0 %v161
  %314 = vmatprep.subr.mxu0 %v18
  %315 = vmatpush1.msra.mxu0 %v17
  %316 = vmatprep.subr.mxu0 %v195
  %317 = vmatpush1.msra.mxu0 %v194
  %318 = vmatprep.subr.mxu0 %v228
  %319 = vmatpush1.msra.mxu0 %v227
  %320 = vmatprep.subr.mxu0 %v261
  %321 = vmatpush1.msra.mxu0 %v260
  %322 = vmatprep.subr.mxu0 %v294
  %323 = vmatpush1.msra.mxu0 %v293
  %324 = vmatprep.subr.mxu0 0.0
  %325 = vmatpush1.msra.mxu0 0.0
  %326 = vmatprep.subr.mxu0 0.0
  %327 = vmatpush1.msra.mxu0 0.0
  %328 = vmatprep.subr.mxu0 0.0
  %329 = vmatpush1.msra.mxu0 0.0
  %330 = vmatprep.subr.mxu0 0.0
  %331 = vmatpush1.msra.mxu0 0.0
  %332 = vmatprep.subr.mxu0 0.0
  %333 = vmatpush1.msra.mxu0 0.0
  %334 = vmatprep.subr.mxu0 0.0
  %335 = vmatpush1.msra.mxu0 0.0
  %336 = vmatprep.subr.mxu0 0.0
  %337 = vmatpush1.msra.mxu0 0.0
  %338 = vmatprep.subr.mxu0 0.0
  %339 = vmatpush1.msra.mxu0 0.0
  %340 = vmatprep.subr.mxu0 0.0
  %341 = vmatpush1.msra.mxu0 0.0
  %342 = vmatprep.subr.mxu0 0.0
  %343 = vmatpush1.msra.mxu0 0.0
  %344 = vmatprep.subr.mxu0 0.0
  %345 = vmatpush1.msra.mxu0 0.0
  %346 = vmatprep.subr.mxu0 0.0
  %347 = vmatpush1.msra.mxu0 0.0
  %348 = vmatprep.subr.mxu0 0.0
  %349 = vmatpush1.msra.mxu0 0.0
  %350 = vmatprep.subr.mxu0 0.0
  %351 = vmatpush1.msra.mxu0 0.0
  %352 = vmatprep.subr.mxu0 0.0
  %353 = vmatpush1.msra.mxu0 0.0
  %354 = vmatprep.subr.mxu0 0.0
  %355 = vmatpush1.msra.mxu0 0.0
  %356 = vmatprep.subr.mxu0 0.0
  %357 = vmatpush1.msra.mxu0 0.0
  %358 = vmatprep.subr.mxu0 0.0
  %359 = vmatpush1.msra.mxu0 0.0
  %360 = vmatprep.subr.mxu0 0.0
  %361 = vmatpush1.msra.mxu0 0.0
  %362 = vmatprep.subr.mxu0 0.0
  %363 = vmatpush1.msra.mxu0 0.0
  %364 = vmatprep.subr.mxu0 0.0
  %365 = vmatpush1.msra.mxu0 0.0
  %366 = vmatprep.subr.mxu0 0.0
  %367 = vmatpush1.msra.mxu0 0.0
  %368 = vmatprep.subr.mxu0 0.0
  %369 = vmatpush1.msra.mxu0 0.0
  %370 = vmatprep.mubr.f32.mxu0 0.0
  %371 = vmatmul.mubr.f32.gmra.mrb[0].mxu0 %v304
  %v372 = vpop.f32.mrb[0].mxu0
  %v373 = vadd.f32 %v300, %v372
  %v374 = vpop.f32.mrb[0].mxu0
  %v375 = vadd.f32 %v300, %v374
  %376 = vdwg.mxu0
  %377 = vmatprep.subr.mxu0 %v65
  %378 = vmatpush1.msra.mxu0 %v64
  %379 = vmatprep.subr.mxu0 %v98
  %380 = vmatpush1.msra.mxu0 %v97
  %381 = vmatprep.subr.mxu0 %v131
  %382 = vmatpush1.msra.mxu0 %v130
  %383 = vmatprep.subr.mxu0 %v164
  %384 = vmatpush1.msra.mxu0 %v163
  %385 = vmatprep.subr.mxu0 %v20
  %386 = vmatpush1.msra.mxu0 %v19
  %387 = vmatprep.subr.mxu0 %v197
  %388 = vmatpush1.msra.mxu0 %v196
  %389 = vmatprep.subr.mxu0 %v230
  %390 = vmatpush1.msra.mxu0 %v229
  %391 = vmatprep.subr.mxu0 %v263
  %392 = vmatpush1.msra.mxu0 %v262
  %393 = vmatprep.subr.mxu0 %v296
  %394 = vmatpush1.msra.mxu0 %v295
  %395 = vmatprep.subr.mxu0 0.0
  %396 = vmatpush1.msra.mxu0 0.0
  %397 = vmatprep.subr.mxu0 0.0
  %398 = vmatpush1.msra.mxu0 0.0
  %399 = vmatprep.subr.mxu0 0.0
  %400 = vmatpush1.msra.mxu0 0.0
  %401 = vmatprep.subr.mxu0 0.0
  %402 = vmatpush1.msra.mxu0 0.0
  %403 = vmatprep.subr.mxu0 0.0
  %404 = vmatpush1.msra.mxu0 0.0
  %405 = vmatprep.subr.mxu0 0.0
  %406 = vmatpush1.msra.mxu0 0.0
  %407 = vmatprep.subr.mxu0 0.0
  %408 = vmatpush1.msra.mxu0 0.0
  %409 = vmatprep.subr.mxu0 0.0
  %410 = vmatpush1.msra.mxu0 0.0
  %411 = vmatprep.subr.mxu0 0.0
  %412 = vmatpush1.msra.mxu0 0.0
  %413 = vmatprep.subr.mxu0 0.0
  %414 = vmatpush1.msra.mxu0 0.0
  %415 = vmatprep.subr.mxu0 0.0
  %416 = vmatpush1.msra.mxu0 0.0
  %417 = vmatprep.subr.mxu0 0.0
  %418 = vmatpush1.msra.mxu0 0.0
  %419 = vmatprep.subr.mxu0 0.0
  %420 = vmatpush1.msra.mxu0 0.0
  %421 = vmatprep.subr.mxu0 0.0
  %422 = vmatpush1.msra.mxu0 0.0
  %423 = vmatprep.subr.mxu0 0.0
  %424 = vmatpush1.msra.mxu0 0.0
  %425 = vmatprep.subr.mxu0 0.0
  %426 = vmatpush1.msra.mxu0 0.0
  %427 = vmatprep.subr.mxu0 0.0
  %428 = vmatpush1.msra.mxu0 0.0
  %429 = vmatprep.subr.mxu0 0.0
  %430 = vmatpush1.msra.mxu0 0.0
  %431 = vmatprep.subr.mxu0 0.0
  %432 = vmatpush1.msra.mxu0 0.0
  %433 = vmatprep.subr.mxu0 0.0
  %434 = vmatpush1.msra.mxu0 0.0
  %435 = vmatprep.subr.mxu0 0.0
  %436 = vmatpush1.msra.mxu0 0.0
  %437 = vmatprep.subr.mxu0 0.0
  %438 = vmatpush1.msra.mxu0 0.0
  %439 = vmatprep.subr.mxu0 0.0
  %440 = vmatpush1.msra.mxu0 0.0
  %441 = vmatprep.mubr.f32.mxu0 0.0
  %442 = vmatmul.mubr.f32.gmra.mrb[0].mxu0 %v304
  %v443 = vpop.f32.mrb[0].mxu0
  %v444 = vadd.f32 %v300, %v443
  %v445 = vpop.f32.mrb[0].mxu0
  %v446 = vadd.f32 %v300, %v445
  %447 = vdwg.mxu0
  %v448 = vmax.f32 %v373, 0.0
  %v449 = vmax.f32 %v375, 0.0
  %v450 = vmax.f32 %v444, 0.0
  %v451 = vmax.f32 %v446, 0.0
  %v452 = vld [vmem:[%s2 + $0x10] sm:$0xff]
  %v453 = vld [vmem:[%s2 + $0x20] sm:$0xff]
  %v454 = vld [vmem:[%s3 + $0x8] sm:$0xff]
  %v455 = vld [vmem:[%s3 + $0x10] sm:$0xff]
  %456 = vrot.lane.b32.xlu0 %v448, 17
  %v457 = vpop.permute.xlu0 %456
  %458 = vrot.lane.b32.xlu0 %v449, 17
  %v459 = vpop.permute.xlu0 %458
  %460 = vrot.lane.b32.xlu0 %v450, 17
  %v461 = vpop.permute.xlu0 %460
  %462 = vrot.lane.b32.xlu0 %v451, 17
  %v463 = vpop.permute.xlu0 %462
  %v464 = vsel %vm41, %v461, %v463
  %v465 = vsel %vm41, %v459, %v461
  %v466 = vsel %vm41, %v457, %v459
  %v467 = vsel %vm41, %v463, %v457
  %v468 = vmul.f32 %v467, %v49
  %v469 = vmul.f32 %v466, %v53
  %v470 = vmul.f32 %v465, %v57
  %v471 = vmul.f32 %v464, %v61
  %472 = vrot.lane.b32.xlu0 %v448, 16
  %v473 = vpop.permute.xlu0 %472
  %474 = vrot.lane.b32.xlu0 %v449, 16
  %v475 = vpop.permute.xlu0 %474
  %476 = vrot.lane.b32.xlu0 %v450, 16
  %v477 = vpop.permute.xlu0 %476
  %478 = vrot.lane.b32.xlu0 %v451, 16
  %v479 = vpop.permute.xlu0 %478
  %v480 = vsel %vm74, %v477, %v479
  %v481 = vsel %vm74, %v475, %v477
  %v482 = vsel %vm74, %v473, %v475
  %v483 = vsel %vm74, %v479, %v473
  %v484 = vmul.f32 %v483, %v82
  %v485 = vmul.f32 %v482, %v86
  %v486 = vmul.f32 %v481, %v90
  %v487 = vmul.f32 %v480, %v94
  %488 = vrot.lane.b32.xlu0 %v448, 15
  %v489 = vpop.permute.xlu0 %488
  %490 = vrot.lane.b32.xlu0 %v449, 15
  %v491 = vpop.permute.xlu0 %490
  %492 = vrot.lane.b32.xlu0 %v450, 15
  %v493 = vpop.permute.xlu0 %492
  %494 = vrot.lane.b32.xlu0 %v451, 15
  %v495 = vpop.permute.xlu0 %494
  %v496 = vsel %vm107, %v493, %v495
  %v497 = vsel %vm107, %v491, %v493
  %v498 = vsel %vm107, %v489, %v491
  %v499 = vsel %vm107, %v495, %v489
  %v500 = vmul.f32 %v499, %v115
  %v501 = vmul.f32 %v498, %v119
  %v502 = vmul.f32 %v497, %v123
  %v503 = vmul.f32 %v496, %v127
  %504 = vrot.lane.b32.xlu0 %v448, 1
  %v505 = vpop.permute.xlu0 %504
  %506 = vrot.lane.b32.xlu0 %v449, 1
  %v507 = vpop.permute.xlu0 %506
  %508 = vrot.lane.b32.xlu0 %v450, 1
  %v509 = vpop.permute.xlu0 %508
  %510 = vrot.lane.b32.xlu0 %v451, 1
  %v511 = vpop.permute.xlu0 %510
  %v512 = vsel %vm140, %v509, %v511
  %v513 = vsel %vm140, %v507, %v509
  %v514 = vsel %vm140, %v505, %v507
  %v515 = vsel %vm140, %v511, %v505
  %v516 = vmul.f32 %v515, %v148
  %v517 = vmul.f32 %v514, %v152
  %v518 = vmul.f32 %v513, %v156
  %v519 = vmul.f32 %v512, %v160
  %520 = vrot.lane.b32.xlu0 %v448, 127
  %v521 = vpop.permute.xlu0 %520
  %522 = vrot.lane.b32.xlu0 %v449, 127
  %v523 = vpop.permute.xlu0 %522
  %524 = vrot.lane.b32.xlu0 %v450, 127
  %v525 = vpop.permute.xlu0 %524
  %526 = vrot.lane.b32.xlu0 %v451, 127
  %v527 = vpop.permute.xlu0 %526
  %v528 = vsel %vm173, %v525, %v527
  %v529 = vsel %vm173, %v523, %v525
  %v530 = vsel %vm173, %v521, %v523
  %v531 = vsel %vm173, %v527, %v521
  %v532 = vmul.f32 %v530, %v181
  %v533 = vmul.f32 %v529, %v185
  %v534 = vmul.f32 %v528, %v189
  %v535 = vmul.f32 %v531, %v193
  %536 = vrot.lane.b32.xlu0 %v448, 113
  %v537 = vpop.permute.xlu0 %536
  %538 = vrot.lane.b32.xlu0 %v449, 113
  %v539 = vpop.permute.xlu0 %538
  %540 = vrot.lane.b32.xlu0 %v450, 113
  %v541 = vpop.permute.xlu0 %540
  %542 = vrot.lane.b32.xlu0 %v451, 113
  %v543 = vpop.permute.xlu0 %542
  %v544 = vsel %vm206, %v541, %v543
  %v545 = vsel %vm206, %v539, %v541
  %v546 = vsel %vm206, %v537, %v539
  %v547 = vsel %vm206, %v543, %v537
  %v548 = vmul.f32 %v546, %v214
  %v549 = vmul.f32 %v545, %v218
  %v550 = vmul.f32 %v544, %v222
  %v551 = vmul.f32 %v547, %v226
  %552 = vrot.lane.b32.xlu0 %v448, 112
  %v553 = vpop.permute.xlu0 %552
  %554 = vrot.lane.b32.xlu0 %v449, 112
  %v555 = vpop.permute.xlu0 %554
  %556 = vrot.lane.b32.xlu0 %v450, 112
  %v557 = vpop.permute.xlu0 %556
  %558 = vrot.lane.b32.xlu0 %v451, 112
  %v559 = vpop.permute.xlu0 %558
  %v560 = vsel %vm239, %v557, %v559
  %v561 = vsel %vm239, %v555, %v557
  %v562 = vsel %vm239, %v553, %v555
  %v563 = vsel %vm239, %v559, %v553
  %v564 = vmul.f32 %v562, %v247
  %v565 = vmul.f32 %v561, %v251
  %v566 = vmul.f32 %v560, %v255
  %v567 = vmul.f32 %v563, %v259
  %568 = vrot.lane.b32.xlu0 %v448, 111
  %v569 = vpop.permute.xlu0 %568
  %570 = vrot.lane.b32.xlu0 %v449, 111
  %v571 = vpop.permute.xlu0 %570
  %572 = vrot.lane.b32.xlu0 %v450, 111
  %v573 = vpop.permute.xlu0 %572
  %574 = vrot.lane.b32.xlu0 %v451, 111
  %v575 = vpop.permute.xlu0 %574
  %v576 = vsel %vm272, %v573, %v575
  %v577 = vsel %vm272, %v571, %v573
  %v578 = vsel %vm272, %v569, %v571
  %v579 = vsel %vm272, %v575, %v569
  %v580 = vmul.f32 %v578, %v280
  %v581 = vmul.f32 %v577, %v284
  %v582 = vmul.f32 %v576, %v288
  %v583 = vmul.f32 %v579, %v292
  %585 = vset.pattern.permute.xlu0 0
  %586 = vperm.xlu0 %585, %v454
  %v587 = vpop.permute.xlu0 %586
  %590 = vset.pattern.permute.xlu0 0
  %591 = vperm.xlu0 %590, %v455
  %v592 = vpop.permute.xlu0 %591
  %v595 = vsel %vm302, %v452, 0
  %v598 = vsel %vm302, %v453, 0
  %600 = vmatprep.subr.mxu0 %v469
  %601 = vmatpush1.msra.mxu0 %v468
  %602 = vmatprep.subr.mxu0 %v485
  %603 = vmatpush1.msra.mxu0 %v484
  %604 = vmatprep.subr.mxu0 %v501
  %605 = vmatpush1.msra.mxu0 %v500
  %606 = vmatprep.subr.mxu0 %v517
  %607 = vmatpush1.msra.mxu0 %v516
  %608 = vmatprep.subr.mxu0 %v449
  %609 = vmatpush1.msra.mxu0 %v448
  %610 = vmatprep.subr.mxu0 %v533
  %611 = vmatpush1.msra.mxu0 %v532
  %612 = vmatprep.subr.mxu0 %v549
  %613 = vmatpush1.msra.mxu0 %v548
  %614 = vmatprep.subr.mxu0 %v565
  %615 = vmatpush1.msra.mxu0 %v564
  %616 = vmatprep.subr.mxu0 %v581
  %617 = vmatpush1.msra.mxu0 %v580
  %618 = vmatprep.subr.mxu0 0.0
  %619 = vmatpush1.msra.mxu0 0.0
  %620 = vmatprep.subr.mxu0 0.0
  %621 = vmatpush1.msra.mxu0 0.0
  %622 = vmatprep.subr.mxu0 0.0
  %623 = vmatpush1.msra.mxu0 0.0
  %624 = vmatprep.subr.mxu0 0.0
  %625 = vmatpush1.msra.mxu0 0.0
  %626 = vmatprep.subr.mxu0 0.0
  %627 = vmatpush1.msra.mxu0 0.0
  %628 = vmatprep.subr.mxu0 0.0
  %629 = vmatpush1.msra.mxu0 0.0
  %630 = vmatprep.subr.mxu0 0.0
  %631 = vmatpush1.msra.mxu0 0.0
  %632 = vmatprep.subr.mxu0 0.0
  %633 = vmatpush1.msra.mxu0 0.0
  %634 = vmatprep.subr.mxu0 0.0
  %635 = vmatpush1.msra.mxu0 0.0
  %636 = vmatprep.subr.mxu0 0.0
  %637 = vmatpush1.msra.mxu0 0.0
  %638 = vmatprep.subr.mxu0 0.0
  %639 = vmatpush1.msra.mxu0 0.0
  %640 = vmatprep.subr.mxu0 0.0
  %641 = vmatpush1.msra.mxu0 0.0
  %642 = vmatprep.subr.mxu0 0.0
  %643 = vmatpush1.msra.mxu0 0.0
  %644 = vmatprep.subr.mxu0 0.0
  %645 = vmatpush1.msra.mxu0 0.0
  %646 = vmatprep.subr.mxu0 0.0
  %647 = vmatpush1.msra.mxu0 0.0
  %648 = vmatprep.subr.mxu0 0.0
  %649 = vmatpush1.msra.mxu0 0.0
  %650 = vmatprep.subr.mxu0 0.0
  %651 = vmatpush1.msra.mxu0 0.0
  %652 = vmatprep.subr.mxu0 0.0
  %653 = vmatpush1.msra.mxu0 0.0
  %654 = vmatprep.subr.mxu0 0.0
  %655 = vmatpush1.msra.mxu0 0.0
  %656 = vmatprep.subr.mxu0 0.0
  %657 = vmatpush1.msra.mxu0 0.0
  %658 = vmatprep.subr.mxu0 0.0
  %659 = vmatpush1.msra.mxu0 0.0
  %660 = vmatprep.subr.mxu0 0.0
  %661 = vmatpush1.msra.mxu0 0.0
  %662 = vmatprep.subr.mxu0 0.0
  %663 = vmatpush1.msra.mxu0 0.0
  %664 = vmatprep.mubr.f32.mxu0 0.0
  %665 = vmatmul.mubr.f32.gmra.mrb[0].mxu0 %v595
  %v666 = vpop.f32.mrb[0].mxu0
  %v667 = vadd.f32 %v587, %v666
  %v668 = vpop.f32.mrb[0].mxu0
  %v669 = vadd.f32 %v587, %v668
  %670 = vmatprep.mubr.f32.mxu0 0.0
  %671 = vmatmul.mubr.f32.gmra.mrb[0].mxu0 %v598
  %v672 = vpop.f32.mrb[0].mxu0
  %v673 = vadd.f32 %v592, %v672
  %v674 = vpop.f32.mrb[0].mxu0
  %v675 = vadd.f32 %v592, %v674
  %676 = vdwg.mxu0
  %677 = vmatprep.subr.mxu0 %v471
  %678 = vmatpush1.msra.mxu0 %v470
  %679 = vmatprep.subr.mxu0 %v487
  %680 = vmatpush1.msra.mxu0 %v486
  %681 = vmatprep.subr.mxu0 %v503
  %682 = vmatpush1.msra.mxu0 %v502
  %683 = vmatprep.subr.mxu0 %v519
  %684 = vmatpush1.msra.mxu0 %v518
  %685 = vmatprep.subr.mxu0 %v451
  %686 = vmatpush1.msra.mxu0 %v450
  %687 = vmatprep.subr.mxu0 %v535
  %688 = vmatpush1.msra.mxu0 %v534
  %689 = vmatprep.subr.mxu0 %v551
  %690 = vmatpush1.msra.mxu0 %v550
  %691 = vmatprep.subr.mxu0 %v567
  %692 = vmatpush1.msra.mxu0 %v566
  %693 = vmatprep.subr.mxu0 %v583
  %694 = vmatpush1.msra.mxu0 %v582
  %695 = vmatprep.subr.mxu0 0.0
  %696 = vmatpush1.msra.mxu0 0.0
  %697 = vmatprep.subr.mxu0 0.0
  %698 = vmatpush1.msra.mxu0 0.0
  %699 = vmatprep.subr.mxu0 0.0
  %700 = vmatpush1.msra.mxu0 0.0
  %701 = vmatprep.subr.mxu0 0.0
  %702 = vmatpush1.msra.mxu0 0.0
  %703 = vmatprep.subr.mxu0 0.0
  %704 = vmatpush1.msra.mxu0 0.0
  %705 = vmatprep.subr.mxu0 0.0
  %706 = vmatpush1.msra.mxu0 0.0
  %707 = vmatprep.subr.mxu0 0.0
  %708 = vmatpush1.msra.mxu0 0.0
  %709 = vmatprep.subr.mxu0 0.0
  %710 = vmatpush1.msra.mxu0 0.0
  %711 = vmatprep.subr.mxu0 0.0
  %712 = vmatpush1.msra.mxu0 0.0
  %713 = vmatprep.subr.mxu0 0.0
  %714 = vmatpush1.msra.mxu0 0.0
  %715 = vmatprep.subr.mxu0 0.0
  %716 = vmatpush1.msra.mxu0 0.0
  %717 = vmatprep.subr.mxu0 0.0
  %718 = vmatpush1.msra.mxu0 0.0
  %719 = vmatprep.subr.mxu0 0.0
  %720 = vmatpush1.msra.mxu0 0.0
  %721 = vmatprep.subr.mxu0 0.0
  %722 = vmatpush1.msra.mxu0 0.0
  %723 = vmatprep.subr.mxu0 0.0
  %724 = vmatpush1.msra.mxu0 0.0
  %725 = vmatprep.subr.mxu0 0.0
  %726 = vmatpush1.msra.mxu0 0.0
  %727 = vmatprep.subr.mxu0 0.0
  %728 = vmatpush1.msra.mxu0 0.0
  %729 = vmatprep.subr.mxu0 0.0
  %730 = vmatpush1.msra.mxu0 0.0
  %731 = vmatprep.subr.mxu0 0.0
  %732 = vmatpush1.msra.mxu0 0.0
  %733 = vmatprep.subr.mxu0 0.0
  %734 = vmatpush1.msra.mxu0 0.0
  %735 = vmatprep.subr.mxu0 0.0
  %736 = vmatpush1.msra.mxu0 0.0
  %737 = vmatprep.subr.mxu0 0.0
  %738 = vmatpush1.msra.mxu0 0.0
  %739 = vmatprep.subr.mxu0 0.0
  %740 = vmatpush1.msra.mxu0 0.0
  %741 = vmatprep.mubr.f32.mxu0 0.0
  %742 = vmatmul.mubr.f32.gmra.mrb[0].mxu0 %v595
  %v743 = vpop.f32.mrb[0].mxu0
  %v744 = vadd.f32 %v587, %v743
  %v745 = vpop.f32.mrb[0].mxu0
  %v746 = vadd.f32 %v587, %v745
  %747 = vmatprep.mubr.f32.mxu0 0.0
  %748 = vmatmul.mubr.f32.gmra.mrb[0].mxu0 %v598
  %v749 = vpop.f32.mrb[0].mxu0
  %v750 = vadd.f32 %v592, %v749
  %v751 = vpop.f32.mrb[0].mxu0
  %v752 = vadd.f32 %v592, %v751
  %753 = vdwg.mxu0
  %v754 = vmax.f32 %v667, 0.0
  %v755 = vmax.f32 %v669, 0.0
  %v756 = vmax.f32 %v744, 0.0
  %v757 = vmax.f32 %v746, 0.0
  %v758 = vmax.f32 %v673, 0.0
  %v759 = vmax.f32 %v675, 0.0
  %v760 = vmax.f32 %v750, 0.0
  %v761 = vmax.f32 %v752, 0.0
  %v762 = vld [vmem:[%s2 + $0x30] sm:$0xff]
  %v763 = vld [vmem:[%s2 + $0x38] sm:$0xff]
  %v764 = vld [vmem:[%s2 + $0x40] sm:$0xff]
  %v765 = vld [vmem:[%s2 + $0x48] sm:$0xff]
  %v766 = vld [vmem:[%s3 + $0x18] sm:$0xff]
  %v767 = vld [vmem:[%s3 + $0x20] sm:$0xff]
  %768 = vrot.lane.b32.xlu0 %v754, 17
  %v769 = vpop.permute.xlu0 %768
  %770 = vrot.lane.b32.xlu0 %v758, 17
  %v771 = vpop.permute.xlu0 %770
  %772 = vrot.lane.b32.xlu0 %v755, 17
  %v773 = vpop.permute.xlu0 %772
  %774 = vrot.lane.b32.xlu0 %v759, 17
  %v775 = vpop.permute.xlu0 %774
  %776 = vrot.lane.b32.xlu0 %v756, 17
  %v777 = vpop.permute.xlu0 %776
  %778 = vrot.lane.b32.xlu0 %v760, 17
  %v779 = vpop.permute.xlu0 %778
  %780 = vrot.lane.b32.xlu0 %v757, 17
  %v781 = vpop.permute.xlu0 %780
  %782 = vrot.lane.b32.xlu0 %v761, 17
  %v783 = vpop.permute.xlu0 %782
  %v784 = vsel %vm41, %v777, %v781
  %v785 = vsel %vm41, %v779, %v783
  %v786 = vsel %vm41, %v773, %v777
  %v787 = vsel %vm41, %v775, %v779
  %v788 = vsel %vm41, %v769, %v773
  %v789 = vsel %vm41, %v771, %v775
  %v790 = vsel %vm41, %v781, %v769
  %v791 = vsel %vm41, %v783, %v771
  %v792 = vmul.f32 %v790, %v49
  %v793 = vmul.f32 %v788, %v53
  %v794 = vmul.f32 %v786, %v57
  %v795 = vmul.f32 %v784, %v61
  %v796 = vmul.f32 %v791, %v49
  %v797 = vmul.f32 %v789, %v53
  %v798 = vmul.f32 %v787, %v57
  %v799 = vmul.f32 %v785, %v61
  %800 = vrot.lane.b32.xlu0 %v754, 16
  %v801 = vpop.permute.xlu0 %800
  %802 = vrot.lane.b32.xlu0 %v758, 16
  %v803 = vpop.permute.xlu0 %802
  %804 = vrot.lane.b32.xlu0 %v755, 16
  %v805 = vpop.permute.xlu0 %804
  %806 = vrot.lane.b32.xlu0 %v759, 16
  %v807 = vpop.permute.xlu0 %806
  %808 = vrot.lane.b32.xlu0 %v756, 16
  %v809 = vpop.permute.xlu0 %808
  %810 = vrot.lane.b32.xlu0 %v760, 16
  %v811 = vpop.permute.xlu0 %810
  %812 = vrot.lane.b32.xlu0 %v757, 16
  %v813 = vpop.permute.xlu0 %812
  %814 = vrot.lane.b32.xlu0 %v761, 16
  %v815 = vpop.permute.xlu0 %814
  %v816 = vsel %vm74, %v809, %v813
  %v817 = vsel %vm74, %v811, %v815
  %v818 = vsel %vm74, %v805, %v809
  %v819 = vsel %vm74, %v807, %v811
  %v820 = vsel %vm74, %v801, %v805
  %v821 = vsel %vm74, %v803, %v807
  %v822 = vsel %vm74, %v813, %v801
  %v823 = vsel %vm74, %v815, %v803
  %v824 = vmul.f32 %v822, %v82
  %v825 = vmul.f32 %v820, %v86
  %v826 = vmul.f32 %v818, %v90
  %v827 = vmul.f32 %v816, %v94
  %v828 = vmul.f32 %v823, %v82
  %v829 = vmul.f32 %v821, %v86
  %v830 = vmul.f32 %v819, %v90
  %v831 = vmul.f32 %v817, %v94
  %832 = vrot.lane.b32.xlu0 %v754, 15
  %v833 = vpop.permute.xlu0 %832
  %834 = vrot.lane.b32.xlu0 %v758, 15
  %v835 = vpop.permute.xlu0 %834
  %836 = vrot.lane.b32.xlu0 %v755, 15
  %v837 = vpop.permute.xlu0 %836
  %838 = vrot.lane.b32.xlu0 %v759, 15
  %v839 = vpop.permute.xlu0 %838
  %840 = vrot.lane.b32.xlu0 %v756, 15
  %v841 = vpop.permute.xlu0 %840
  %842 = vrot.lane.b32.xlu0 %v760, 15
  %v843 = vpop.permute.xlu0 %842
  %844 = vrot.lane.b32.xlu0 %v757, 15
  %v845 = vpop.permute.xlu0 %844
  %846 = vrot.lane.b32.xlu0 %v761, 15
  %v847 = vpop.permute.xlu0 %846
  %v848 = vsel %vm107, %v841, %v845
  %v849 = vsel %vm107, %v843, %v847
  %v850 = vsel %vm107, %v837, %v841
  %v851 = vsel %vm107, %v839, %v843
  %v852 = vsel %vm107, %v833, %v837
  %v853 = vsel %vm107, %v835, %v839
  %v854 = vsel %vm107, %v845, %v833
  %v855 = vsel %vm107, %v847, %v835
  %v856 = vmul.f32 %v854, %v115
  %v857 = vmul.f32 %v852, %v119
  %v858 = vmul.f32 %v850, %v123
  %v859 = vmul.f32 %v848, %v127
  %v860 = vmul.f32 %v855, %v115
  %v861 = vmul.f32 %v853, %v119
  %v862 = vmul.f32 %v851, %v123
  %v863 = vmul.f32 %v849, %v127
  %864 = vrot.lane.b32.xlu0 %v754, 1
  %v865 = vpop.permute.xlu0 %864
  %866 = vrot.lane.b32.xlu0 %v758, 1
  %v867 = vpop.permute.xlu0 %866
  %868 = vrot.lane.b32.xlu0 %v755, 1
  %v869 = vpop.permute.xlu0 %868
  %870 = vrot.lane.b32.xlu0 %v759, 1
  %v871 = vpop.permute.xlu0 %870
  %872 = vrot.lane.b32.xlu0 %v756, 1
  %v873 = vpop.permute.xlu0 %872
  %874 = vrot.lane.b32.xlu0 %v760, 1
  %v875 = vpop.permute.xlu0 %874
  %876 = vrot.lane.b32.xlu0 %v757, 1
  %v877 = vpop.permute.xlu0 %876
  %878 = vrot.lane.b32.xlu0 %v761, 1
  %v879 = vpop.permute.xlu0 %878
  %v880 = vsel %vm140, %v873, %v877
  %v881 = vsel %vm140, %v875, %v879
  %v882 = vsel %vm140, %v869, %v873
  %v883 = vsel %vm140, %v871, %v875
  %v884 = vsel %vm140, %v865, %v869
  %v885 = vsel %vm140, %v867, %v871
  %v886 = vsel %vm140, %v877, %v865
  %v887 = vsel %vm140, %v879, %v867
  %v888 = vmul.f32 %v886, %v148
  %v889 = vmul.f32 %v884, %v152
  %v890 = vmul.f32 %v882, %v156
  %v891 = vmul.f32 %v880, %v160
  %v892 = vmul.f32 %v887, %v148
  %v893 = vmul.f32 %v885, %v152
  %v894 = vmul.f32 %v883, %v156
  %v895 = vmul.f32 %v881, %v160
  %896 = vrot.lane.b32.xlu0 %v754, 127
  %v897 = vpop.permute.xlu0 %896
  %898 = vrot.lane.b32.xlu0 %v758, 127
  %v899 = vpop.permute.xlu0 %898
  %900 = vrot.lane.b32.xlu0 %v755, 127
  %v901 = vpop.permute.xlu0 %900
  %902 = vrot.lane.b32.xlu0 %v759, 127
  %v903 = vpop.permute.xlu0 %902
  %904 = vrot.lane.b32.xlu0 %v756, 127
  %v905 = vpop.permute.xlu0 %904
  %906 = vrot.lane.b32.xlu0 %v760, 127
  %v907 = vpop.permute.xlu0 %906
  %908 = vrot.lane.b32.xlu0 %v757, 127
  %v909 = vpop.permute.xlu0 %908
  %910 = vrot.lane.b32.xlu0 %v761, 127
  %v911 = vpop.permute.xlu0 %910
  %v912 = vsel %vm173, %v905, %v909
  %v913 = vsel %vm173, %v907, %v911
  %v914 = vsel %vm173, %v901, %v905
  %v915 = vsel %vm173, %v903, %v907
  %v916 = vsel %vm173, %v897, %v901
  %v917 = vsel %vm173, %v899, %v903
  %v918 = vsel %vm173, %v909, %v897
  %v919 = vsel %vm173, %v911, %v899
  %v920 = vmul.f32 %v916, %v181
  %v921 = vmul.f32 %v914, %v185
  %v922 = vmul.f32 %v912, %v189
  %v923 = vmul.f32 %v918, %v193
  %v924 = vmul.f32 %v917, %v181
  %v925 = vmul.f32 %v915, %v185
  %v926 = vmul.f32 %v913, %v189
  %v927 = vmul.f32 %v919, %v193
  %928 = vrot.lane.b32.xlu0 %v754, 113
  %v929 = vpop.permute.xlu0 %928
  %930 = vrot.lane.b32.xlu0 %v758, 113
  %v931 = vpop.permute.xlu0 %930
  %932 = vrot.lane.b32.xlu0 %v755, 113
  %v933 = vpop.permute.xlu0 %932
  %934 = vrot.lane.b32.xlu0 %v759, 113
  %v935 = vpop.permute.xlu0 %934
  %936 = vrot.lane.b32.xlu0 %v756, 113
  %v937 = vpop.permute.xlu0 %936
  %938 = vrot.lane.b32.xlu0 %v760, 113
  %v939 = vpop.permute.xlu0 %938
  %940 = vrot.lane.b32.xlu0 %v757, 113
  %v941 = vpop.permute.xlu0 %940
  %942 = vrot.lane.b32.xlu0 %v761, 113
  %v943 = vpop.permute.xlu0 %942
  %v944 = vsel %vm206, %v937, %v941
  %v945 = vsel %vm206, %v939, %v943
  %v946 = vsel %vm206, %v933, %v937
  %v947 = vsel %vm206, %v935, %v939
  %v948 = vsel %vm206, %v929, %v933
  %v949 = vsel %vm206, %v931, %v935
  %v950 = vsel %vm206, %v941, %v929
  %v951 = vsel %vm206, %v943, %v931
  %v952 = vmul.f32 %v948, %v214
  %v953 = vmul.f32 %v946, %v218
  %v954 = vmul.f32 %v944, %v222
  %v955 = vmul.f32 %v950, %v226
  %v956 = vmul.f32 %v949, %v214
  %v957 = vmul.f32 %v947, %v218
  %v958 = vmul.f32 %v945, %v222
  %v959 = vmul.f32 %v951, %v226
  %960 = vrot.lane.b32.xlu0 %v754, 112
  %v961 = vpop.permute.xlu0 %960
  %962 = vrot.lane.b32.xlu0 %v758, 112
  %v963 = vpop.permute.xlu0 %962
  %964 = vrot.lane.b32.xlu0 %v755, 112
  %v965 = vpop.permute.xlu0 %964
  %966 = vrot.lane.b32.xlu0 %v759, 112
  %v967 = vpop.permute.xlu0 %966
  %968 = vrot.lane.b32.xlu0 %v756, 112
  %v969 = vpop.permute.xlu0 %968
  %970 = vrot.lane.b32.xlu0 %v760, 112
  %v971 = vpop.permute.xlu0 %970
  %972 = vrot.lane.b32.xlu0 %v757, 112
  %v973 = vpop.permute.xlu0 %972
  %974 = vrot.lane.b32.xlu0 %v761, 112
  %v975 = vpop.permute.xlu0 %974
  %v976 = vsel %vm239, %v969, %v973
  %v977 = vsel %vm239, %v971, %v975
  %v978 = vsel %vm239, %v965, %v969
  %v979 = vsel %vm239, %v967, %v971
  %v980 = vsel %vm239, %v961, %v965
  %v981 = vsel %vm239, %v963, %v967
  %v982 = vsel %vm239, %v973, %v961
  %v983 = vsel %vm239, %v975, %v963
  %v984 = vmul.f32 %v980, %v247
  %v985 = vmul.f32 %v978, %v251
  %v986 = vmul.f32 %v976, %v255
  %v987 = vmul.f32 %v982, %v259
  %v988 = vmul.f32 %v981, %v247
  %v989 = vmul.f32 %v979, %v251
  %v990 = vmul.f32 %v977, %v255
  %v991 = vmul.f32 %v983, %v259
  %992 = vrot.lane.b32.xlu0 %v754, 111
  %v993 = vpop.permute.xlu0 %992
  %994 = vrot.lane.b32.xlu0 %v758, 111
  %v995 = vpop.permute.xlu0 %994
  %996 = vrot.lane.b32.xlu0 %v755, 111
  %v997 = vpop.permute.xlu0 %996
  %998 = vrot.lane.b32.xlu0 %v759, 111
  %v999 = vpop.permute.xlu0 %998
  %1000 = vrot.lane.b32.xlu0 %v756, 111
  %v1001 = vpop.permute.xlu0 %1000
  %1002 = vrot.lane.b32.xlu0 %v760, 111
  %v1003 = vpop.permute.xlu0 %1002
  %1004 = vrot.lane.b32.xlu0 %v757, 111
  %v1005 = vpop.permute.xlu0 %1004
  %1006 = vrot.lane.b32.xlu0 %v761, 111
  %v1007 = vpop.permute.xlu0 %1006
  %v1008 = vsel %vm272, %v1001, %v1005
  %v1009 = vsel %vm272, %v1003, %v1007
  %v1010 = vsel %vm272, %v997, %v1001
  %v1011 = vsel %vm272, %v999, %v1003
  %v1012 = vsel %vm272, %v993, %v997
  %v1013 = vsel %vm272, %v995, %v999
  %v1014 = vsel %vm272, %v1005, %v993
  %v1015 = vsel %vm272, %v1007, %v995
  %v1016 = vmul.f32 %v1012, %v280
  %v1017 = vmul.f32 %v1010, %v284
  %v1018 = vmul.f32 %v1008, %v288
  %v1019 = vmul.f32 %v1014, %v292
  %v1020 = vmul.f32 %v1013, %v280
  %v1021 = vmul.f32 %v1011, %v284
  %v1022 = vmul.f32 %v1009, %v288
  %v1023 = vmul.f32 %v1015, %v292
  %1025 = vset.pattern.permute.xlu0 0
  %1026 = vperm.xlu0 %1025, %v766
  %v1027 = vpop.permute.xlu0 %1026
  %1030 = vset.pattern.permute.xlu0 0
  %1031 = vperm.xlu0 %1030, %v767
  %v1032 = vpop.permute.xlu0 %1031
  %vm1034 = vcmask 130048
  %v1036 = vsel %vm1034, %v763, 0
  %v1039 = vsel %vm1034, %v765, 0
  %1041 = vmatprep.subr.mxu0 %v793
  %1042 = vmatpush1.msra.mxu0 %v792
  %1043 = vmatprep.subr.mxu0 %v797
  %1044 = vmatpush1.msra.mxu0 %v796
  %1045 = vmatprep.subr.mxu0 %v825
  %1046 = vmatpush1.msra.mxu0 %v824
  %1047 = vmatprep.subr.mxu0 %v829
  %1048 = vmatpush1.msra.mxu0 %v828
  %1049 = vmatprep.subr.mxu0 %v857
  %1050 = vmatpush1.msra.mxu0 %v856
  %1051 = vmatprep.subr.mxu0 %v861
  %1052 = vmatpush1.msra.mxu0 %v860
  %1053 = vmatprep.subr.mxu0 %v889
  %1054 = vmatpush1.msra.mxu0 %v888
  %1055 = vmatprep.subr.mxu0 %v893
  %1056 = vmatpush1.msra.mxu0 %v892
  %1057 = vmatprep.subr.mxu0 %v755
  %1058 = vmatpush1.msra.mxu0 %v754
  %1059 = vmatprep.subr.mxu0 %v759
  %1060 = vmatpush1.msra.mxu0 %v758
  %1061 = vmatprep.subr.mxu0 %v921
  %1062 = vmatpush1.msra.mxu0 %v920
  %1063 = vmatprep.subr.mxu0 %v925
  %1064 = vmatpush1.msra.mxu0 %v924
  %1065 = vmatprep.subr.mxu0 %v953
  %1066 = vmatpush1.msra.mxu0 %v952
  %1067 = vmatprep.subr.mxu0 %v957
  %1068 = vmatpush1.msra.mxu0 %v956
  %1069 = vmatprep.subr.mxu0 %v985
  %1070 = vmatpush1.msra.mxu0 %v984
  %1071 = vmatprep.subr.mxu0 %v989
  %1072 = vmatpush1.msra.mxu0 %v988
  %1073 = vmatprep.subr.mxu0 %v1017
  %1074 = vmatpush1.msra.mxu0 %v1016
  %1075 = vmatprep.subr.mxu0 %v1021
  %1076 = vmatpush1.msra.mxu0 %v1020
  %1077 = vmatprep.subr.mxu0 0.0
  %1078 = vmatpush1.msra.mxu0 0.0
  %1079 = vmatprep.subr.mxu0 0.0
  %1080 = vmatpush1.msra.mxu0 0.0
  %1081 = vmatprep.subr.mxu0 0.0
  %1082 = vmatpush1.msra.mxu0 0.0
  %1083 = vmatprep.subr.mxu0 0.0
  %1084 = vmatpush1.msra.mxu0 0.0
  %1085 = vmatprep.subr.mxu0 0.0
  %1086 = vmatpush1.msra.mxu0 0.0
  %1087 = vmatprep.subr.mxu0 0.0
  %1088 = vmatpush1.msra.mxu0 0.0
  %1089 = vmatprep.subr.mxu0 0.0
  %1090 = vmatpush1.msra.mxu0 0.0
  %1091 = vmatprep.subr.mxu0 0.0
  %1092 = vmatpush1.msra.mxu0 0.0
  %1093 = vmatprep.subr.mxu0 0.0
  %1094 = vmatpush1.msra.mxu0 0.0
  %1095 = vmatprep.subr.mxu0 0.0
  %1096 = vmatpush1.msra.mxu0 0.0
  %1097 = vmatprep.subr.mxu0 0.0
  %1098 = vmatpush1.msra.mxu0 0.0
  %1099 = vmatprep.subr.mxu0 0.0
  %1100 = vmatpush1.msra.mxu0 0.0
  %1101 = vmatprep.subr.mxu0 0.0
  %1102 = vmatpush1.msra.mxu0 0.0
  %1103 = vmatprep.subr.mxu0 0.0
  %1104 = vmatpush1.msra.mxu0 0.0
  %1105 = vmatprep.mubr.f32.mxu0 %v1036
  %1106 = vmatmul.mubr.f32.gmra.mrb[0].mxu0 %v762
  %v1107 = vpop.f32.mrb[0].mxu0
  %v1108 = vadd.f32 %v1027, %v1107
  %v1109 = vpop.f32.mrb[0].mxu0
  %v1110 = vadd.f32 %v1027, %v1109
  %1111 = vmatprep.mubr.f32.mxu0 %v1039
  %1112 = vmatmul.mubr.f32.gmra.mrb[0].mxu0 %v764
  %v1113 = vpop.f32.mrb[0].mxu0
  %v1114 = vadd.f32 %v1032, %v1113
  %v1115 = vpop.f32.mrb[0].mxu0
  %v1116 = vadd.f32 %v1032, %v1115
  %1117 = vdwg.mxu0
  %1118 = vmatprep.subr.mxu0 %v795
  %1119 = vmatpush1.msra.mxu0 %v794
  %1120 = vmatprep.subr.mxu0 %v799
  %1121 = vmatpush1.msra.mxu0 %v798
  %1122 = vmatprep.subr.mxu0 %v827
  %1123 = vmatpush1.msra.mxu0 %v826
  %1124 = vmatprep.subr.mxu0 %v831
  %1125 = vmatpush1.msra.mxu0 %v830
  %1126 = vmatprep.subr.mxu0 %v859
  %1127 = vmatpush1.msra.mxu0 %v858
  %1128 = vmatprep.subr.mxu0 %v863
  %1129 = vmatpush1.msra.mxu0 %v862
  %1130 = vmatprep.subr.mxu0 %v891
  %1131 = vmatpush1.msra.mxu0 %v890
  %1132 = vmatprep.subr.mxu0 %v895
  %1133 = vmatpush1.msra.mxu0 %v894
  %1134 = vmatprep.subr.mxu0 %v757
  %1135 = vmatpush1.msra.mxu0 %v756
  %1136 = vmatprep.subr.mxu0 %v761
  %1137 = vmatpush1.msra.mxu0 %v760
  %1138 = vmatprep.subr.mxu0 %v923
  %1139 = vmatpush1.msra.mxu0 %v922
  %1140 = vmatprep.subr.mxu0 %v927
  %1141 = vmatpush1.msra.mxu0 %v926
  %1142 = vmatprep.subr.mxu0 %v955
  %1143 = vmatpush1.msra.mxu0 %v954
  %1144 = vmatprep.subr.mxu0 %v959
  %1145 = vmatpush1.msra.mxu0 %v958
  %1146 = vmatprep.subr.mxu0 %v987
  %1147 = vmatpush1.msra.mxu0 %v986
  %1148 = vmatprep.subr.mxu0 %v991
  %1149 = vmatpush1.msra.mxu0 %v990
  %1150 = vmatprep.subr.mxu0 %v1019
  %1151 = vmatpush1.msra.mxu0 %v1018
  %1152 = vmatprep.subr.mxu0 %v1023
  %1153 = vmatpush1.msra.mxu0 %v1022
  %1154 = vmatprep.subr.mxu0 0.0
  %1155 = vmatpush1.msra.mxu0 0.0
  %1156 = vmatprep.subr.mxu0 0.0
  %1157 = vmatpush1.msra.mxu0 0.0
  %1158 = vmatprep.subr.mxu0 0.0
  %1159 = vmatpush1.msra.mxu0 0.0
  %1160 = vmatprep.subr.mxu0 0.0
  %1161 = vmatpush1.msra.mxu0 0.0
  %1162 = vmatprep.subr.mxu0 0.0
  %1163 = vmatpush1.msra.mxu0 0.0
  %1164 = vmatprep.subr.mxu0 0.0
  %1165 = vmatpush1.msra.mxu0 0.0
  %1166 = vmatprep.subr.mxu0 0.0
  %1167 = vmatpush1.msra.mxu0 0.0
  %1168 = vmatprep.subr.mxu0 0.0
  %1169 = vmatpush1.msra.mxu0 0.0
  %1170 = vmatprep.subr.mxu0 0.0
  %1171 = vmatpush1.msra.mxu0 0.0
  %1172 = vmatprep.subr.mxu0 0.0
  %1173 = vmatpush1.msra.mxu0 0.0
  %1174 = vmatprep.subr.mxu0 0.0
  %1175 = vmatpush1.msra.mxu0 0.0
  %1176 = vmatprep.subr.mxu0 0.0
  %1177 = vmatpush1.msra.mxu0 0.0
  %1178 = vmatprep.subr.mxu0 0.0
  %1179 = vmatpush1.msra.mxu0 0.0
  %1180 = vmatprep.subr.mxu0 0.0
  %1181 = vmatpush1.msra.mxu0 0.0
  %1182 = vmatprep.mubr.f32.mxu0 %v1036
  %1183 = vmatmul.mubr.f32.gmra.mrb[0].mxu0 %v762
  %v1184 = vpop.f32.mrb[0].mxu0
  %v1185 = vadd.f32 %v1027, %v1184
  %v1186 = vpop.f32.mrb[0].mxu0
  %v1187 = vadd.f32 %v1027, %v1186
  %1188 = vmatprep.mubr.f32.mxu0 %v1039
  %1189 = vmatmul.mubr.f32.gmra.mrb[0].mxu0 %v764
  %v1190 = vpop.f32.mrb[0].mxu0
  %v1191 = vadd.f32 %v1032, %v1190
  %v1192 = vpop.f32.mrb[0].mxu0
  %v1193 = vadd.f32 %v1032, %v1192
  %1194 = vdwg.mxu0
  %v1195 = vmax.f32 %v1108, 0.0
  %v1196 = vmax.f32 %v1110, 0.0
  %v1197 = vmax.f32 %v1185, 0.0
  %v1198 = vmax.f32 %v1187, 0.0
  %v1199 = vmax.f32 %v1114, 0.0
  %v1200 = vmax.f32 %v1116, 0.0
  %v1201 = vmax.f32 %v1191, 0.0
  %v1202 = vmax.f32 %v1193, 0.0
  %v1203 = vld [vmem:[%s2 + $0x50] sm:$0x3]
  %v1204 = vld [vmem:[%s3 + $0x28] sm:$0x3]
  %1206 = vset.pattern.permute.xlu0 0
  %1207 = vperm.xlu0 %1206, %v1204
  %v1208 = vpop.permute.xlu0 %1207
  %v1211 = vsel %vm1034, %v1203, 0
  %1213 = vmatprep.subr.mxu0 %v1196
  %1214 = vmatpush1.msra.mxu0 %v1195
  %1215 = vmatprep.subr.mxu0 %v1200
  %1216 = vmatpush1.msra.mxu0 %v1199
  %1217 = vmatprep.subr.mxu0 0.0
  %1218 = vmatpush1.msra.mxu0 0.0
  %1219 = vmatprep.subr.mxu0 0.0
  %1220 = vmatpush1.msra.mxu0 0.0
  %1221 = vmatprep.subr.mxu0 0.0
  %1222 = vmatpush1.msra.mxu0 0.0
  %1223 = vmatprep.subr.mxu0 0.0
  %1224 = vmatpush1.msra.mxu0 0.0
  %1225 = vmatprep.subr.mxu0 0.0
  %1226 = vmatpush1.msra.mxu0 0.0
  %1227 = vmatprep.subr.mxu0 0.0
  %1228 = vmatpush1.msra.mxu0 0.0
  %1229 = vmatprep.subr.mxu0 0.0
  %1230 = vmatpush1.msra.mxu0 0.0
  %1231 = vmatprep.subr.mxu0 0.0
  %1232 = vmatpush1.msra.mxu0 0.0
  %1233 = vmatprep.subr.mxu0 0.0
  %1234 = vmatpush1.msra.mxu0 0.0
  %1235 = vmatprep.subr.mxu0 0.0
  %1236 = vmatpush1.msra.mxu0 0.0
  %1237 = vmatprep.subr.mxu0 0.0
  %1238 = vmatpush1.msra.mxu0 0.0
  %1239 = vmatprep.subr.mxu0 0.0
  %1240 = vmatpush1.msra.mxu0 0.0
  %1241 = vmatprep.subr.mxu0 0.0
  %1242 = vmatpush1.msra.mxu0 0.0
  %1243 = vmatprep.subr.mxu0 0.0
  %1244 = vmatpush1.msra.mxu0 0.0
  %1245 = vmatprep.subr.mxu0 0.0
  %1246 = vmatpush1.msra.mxu0 0.0
  %1247 = vmatprep.subr.mxu0 0.0
  %1248 = vmatpush1.msra.mxu0 0.0
  %1249 = vmatprep.subr.mxu0 0.0
  %1250 = vmatpush1.msra.mxu0 0.0
  %1251 = vmatprep.subr.mxu0 0.0
  %1252 = vmatpush1.msra.mxu0 0.0
  %1253 = vmatprep.subr.mxu0 0.0
  %1254 = vmatpush1.msra.mxu0 0.0
  %1255 = vmatprep.subr.mxu0 0.0
  %1256 = vmatpush1.msra.mxu0 0.0
  %1257 = vmatprep.subr.mxu0 0.0
  %1258 = vmatpush1.msra.mxu0 0.0
  %1259 = vmatprep.subr.mxu0 0.0
  %1260 = vmatpush1.msra.mxu0 0.0
  %1261 = vmatprep.subr.mxu0 0.0
  %1262 = vmatpush1.msra.mxu0 0.0
  %1263 = vmatprep.subr.mxu0 0.0
  %1264 = vmatpush1.msra.mxu0 0.0
  %1265 = vmatprep.subr.mxu0 0.0
  %1266 = vmatpush1.msra.mxu0 0.0
  %1267 = vmatprep.subr.mxu0 0.0
  %1268 = vmatpush1.msra.mxu0 0.0
  %1269 = vmatprep.subr.mxu0 0.0
  %1270 = vmatpush1.msra.mxu0 0.0
  %1271 = vmatprep.subr.mxu0 0.0
  %1272 = vmatpush1.msra.mxu0 0.0
  %1273 = vmatprep.subr.mxu0 0.0
  %1274 = vmatpush1.msra.mxu0 0.0
  %1275 = vmatprep.subr.mxu0 0.0
  %1276 = vmatpush1.msra.mxu0 0.0
  %1277 = vmatprep.mubr.f32.mxu0 0.0
  %1278 = vmatmul.mubr.f32.gmra.mrb[0].mxu0 %v1211
  %v1279 = vpop.f32.mrb[0].mxu0
  %v1280 = vadd.f32 %v1208, %v1279
  %v1281 = vpop.f32.mrb[0].mxu0
  %v1282 = vadd.f32 %v1208, %v1281
  %1283 = vdwg.mxu0
  %1284 = vmatprep.subr.mxu0 %v1198
  %1285 = vmatpush1.msra.mxu0 %v1197
  %1286 = vmatprep.subr.mxu0 %v1202
  %1287 = vmatpush1.msra.mxu0 %v1201
  %1288 = vmatprep.subr.mxu0 0.0
  %1289 = vmatpush1.msra.mxu0 0.0
  %1290 = vmatprep.subr.mxu0 0.0
  %1291 = vmatpush1.msra.mxu0 0.0
  %1292 = vmatprep.subr.mxu0 0.0
  %1293 = vmatpush1.msra.mxu0 0.0
  %1294 = vmatprep.subr.mxu0 0.0
  %1295 = vmatpush1.msra.mxu0 0.0
  %1296 = vmatprep.subr.mxu0 0.0
  %1297 = vmatpush1.msra.mxu0 0.0
  %1298 = vmatprep.subr.mxu0 0.0
  %1299 = vmatpush1.msra.mxu0 0.0
  %1300 = vmatprep.subr.mxu0 0.0
  %1301 = vmatpush1.msra.mxu0 0.0
  %1302 = vmatprep.subr.mxu0 0.0
  %1303 = vmatpush1.msra.mxu0 0.0
  %1304 = vmatprep.subr.mxu0 0.0
  %1305 = vmatpush1.msra.mxu0 0.0
  %1306 = vmatprep.subr.mxu0 0.0
  %1307 = vmatpush1.msra.mxu0 0.0
  %1308 = vmatprep.subr.mxu0 0.0
  %1309 = vmatpush1.msra.mxu0 0.0
  %1310 = vmatprep.subr.mxu0 0.0
  %1311 = vmatpush1.msra.mxu0 0.0
  %1312 = vmatprep.subr.mxu0 0.0
  %1313 = vmatpush1.msra.mxu0 0.0
  %1314 = vmatprep.subr.mxu0 0.0
  %1315 = vmatpush1.msra.mxu0 0.0
  %1316 = vmatprep.subr.mxu0 0.0
  %1317 = vmatpush1.msra.mxu0 0.0
  %1318 = vmatprep.subr.mxu0 0.0
  %1319 = vmatpush1.msra.mxu0 0.0
  %1320 = vmatprep.subr.mxu0 0.0
  %1321 = vmatpush1.msra.mxu0 0.0
  %1322 = vmatprep.subr.mxu0 0.0
  %1323 = vmatpush1.msra.mxu0 0.0
  %1324 = vmatprep.subr.mxu0 0.0
  %1325 = vmatpush1.msra.mxu0 0.0
  %1326 = vmatprep.subr.mxu0 0.0
  %1327 = vmatpush1.msra.mxu0 0.0
  %1328 = vmatprep.subr.mxu0 0.0
  %1329 = vmatpush1.msra.mxu0 0.0
  %1330 = vmatprep.subr.mxu0 0.0
  %1331 = vmatpush1.msra.mxu0 0.0
  %1332 = vmatprep.subr.mxu0 0.0
  %1333 = vmatpush1.msra.mxu0 0.0
  %1334 = vmatprep.subr.mxu0 0.0
  %1335 = vmatpush1.msra.mxu0 0.0
  %1336 = vmatprep.subr.mxu0 0.0
  %1337 = vmatpush1.msra.mxu0 0.0
  %1338 = vmatprep.subr.mxu0 0.0
  %1339 = vmatpush1.msra.mxu0 0.0
  %1340 = vmatprep.subr.mxu0 0.0
  %1341 = vmatpush1.msra.mxu0 0.0
  %1342 = vmatprep.subr.mxu0 0.0
  %1343 = vmatpush1.msra.mxu0 0.0
  %1344 = vmatprep.subr.mxu0 0.0
  %1345 = vmatpush1.msra.mxu0 0.0
  %1346 = vmatprep.subr.mxu0 0.0
  %1347 = vmatpush1.msra.mxu0 0.0
  %1348 = vmatprep.mubr.f32.mxu0 0.0
  %1349 = vmatmul.mubr.f32.gmra.mrb[0].mxu0 %v1211
  %v1350 = vpop.f32.mrb[0].mxu0
  %v1351 = vadd.f32 %v1208, %v1350
  %v1352 = vpop.f32.mrb[0].mxu0
  %v1353 = vadd.f32 %v1208, %v1352
  %1354 = vdwg.mxu0
  %v1359 = vcombine.low %v1280, %v1282
  %v1360 = vcombine.low %v1351, %v1353
  %v1362 = vunpack.c.l.s4 1983009808
  %v1363 = vunpack.c.0.s8 %v1362
  %v1364 = vlaneseq
  %v1365 = vshrl.u32 %v1364, 7
  %v1366 = vsub.s32 %v1363, %v1365
  %v1367 = vrot.slane %v1359, %v1366
  %v1369 = vunpack.c.l.s4 1983009808
  %v1370 = vunpack.c.0.s8 %v1369
  %v1371 = vlaneseq
  %v1372 = vshrl.u32 %v1371, 7
  %v1373 = vsub.s32 %v1370, %v1372
  %v1374 = vrot.slane %v1360, %v1373
  %v1375 = vcombine.low %v1367, %v1374
  %1377 = vst [vmem:[%s4] sm:$0xff] %v1375
  // Predicated region
  $region18: #{multiview_net_forward.1} parent=0 // pred_check
    _
  $region19: #{multiview_net_forward.1} parent=0 // pred_check_branch
    %1379 = sbr.rel (0) target = $region21
  $region20: #{multiview_net_forward.1} parent=0 // pred_region
    _
  $region21: #{multiview_net_forward.1} parent=0 // pred_fallthru
    _
  // Predicated region
  $region22: #{multiview_net_forward.1} parent=0 // pred_check
    _
  $region23: #{multiview_net_forward.1} parent=0 // pred_check_branch
    %1381 = sbr.rel (0) target = $region25
  $region24: #{multiview_net_forward.1} parent=0 // pred_region
    _
  $region25: #{multiview_net_forward.1} parent=0 // pred_fallthru
    _

</llo_original>
